<compile_context>
chip_gen: v6e
topology: v6e:2x2x1
jax: 0.10.0
libtpu: 0.0.40
codegen_flags: <defaults>
</compile_context>

<pallas_src>
import functools

import jax
import jax.numpy as jnp
from jax.experimental import pallas as pl
from jax.experimental.pallas import tpu as pltpu

LAMBDA_COORD = 5.0
LAMBDA_NOOBJ = 0.5

_VMEM_TILE_BUDGET = 20 * 1024 * 1024   # budget for pipeline buffers + f32 temps
_VMEM_LIMIT_BYTES = 48 * 1024 * 1024   # scoped VMEM limit handed to Mosaic
_MAX_TILE_ROWS = 8192
_MIN_TILE_ROWS = 512


def _pick_tile_rows(n_rows, d, in_itemsize):
    """Adaptive row-tile size.

    Whole problem in one full-extent block if it fits the VMEM budget,
    otherwise the largest multiple-of-8 tile that keeps the double-buffered
    input pipeline plus ~6 full-tile f32 temporaries inside the budget.
    """
    lanes = max(128, ((d + 127) // 128) * 128)       # VMEM lane-pads the last dim
    # 2 inputs x 2 pipeline buffers (input dtype) + ~6 full-tile f32 temporaries
    bytes_per_row = lanes * (2 * 2 * in_itemsize + 6 * 4)
    cap = _VMEM_TILE_BUDGET // bytes_per_row
    cap = min(_MAX_TILE_ROWS, max(_MIN_TILE_ROWS, (cap // 8) * 8))
    if n_rows <= cap:
        return n_rows, 1                             # single full-extent block
    return cap, pl.cdiv(n_rows, cap)


def _yolo_loss_kernel(pred_ref, targ_ref, out_ref, *, n_rows, tile_rows, n_cls):
    """One grid step: fold a (tile_rows, D) row-tile into six scalars and add
    them into the lane-resident (8, 128) accumulator with a single full-vreg RMW.

    Accumulator lanes: 0 sum_xy, 1 sum_wh, 2 sum_obj, 3 sum_noobj,
                       4 sum_cls, 5 count_obj.  (All 8 rows hold equal values.)
    """
    step = pl.program_id(0)

    @pl.when(step == 0)
    def _init():
        out_ref[...] = jnp.zeros_like(out_ref)

    # D (<= 128) is a single lane-tile, so one load + cast is already minimal;
    # the per-channel slices below reuse the same vregs.
    p = pred_ref[...].astype(jnp.float32)            # (R, D)
    t = targ_ref[...].astype(jnp.float32)

    # Ragged-tail mask: the last tile may extend past n_rows (padding is
    # undefined).  Selects (not multiplies) keep NaN/Inf garbage out.
    row_idx = (jax.lax.broadcasted_iota(jnp.int32, (tile_rows, 1), 0)
               + step * tile_rows)
    valid = row_idx < n_rows                          # (R, 1) bool

    t_obj = t[:, 4:5]
    is_obj = t_obj > 0.0
    obj = jnp.logical_and(valid, is_obj)              # responsible cells
    noobj = jnp.logical_and(valid, jnp.logical_not(is_obj))

    # --- xy: sigmoid on predictions, obj-masked squared error ---
    d_xy = jax.nn.sigmoid(p[:, 0:2]) - t[:, 0:2]
    s_xy = jnp.sum(jnp.where(obj, d_xy * d_xy, 0.0))

    # --- wh: sqrt of clamped values, obj-masked squared error ---
    d_wh = (jnp.sqrt(jnp.maximum(p[:, 2:4], 1e-6))
            - jnp.sqrt(jnp.maximum(t[:, 2:4], 1e-6)))
    s_wh = jnp.sum(jnp.where(obj, d_wh * d_wh, 0.0))

    # --- objectness MSE: obj and noobj parts share the squared difference ---
    d_o = p[:, 4:5] - t_obj
    sq_o = d_o * d_o
    s_obj = jnp.sum(jnp.where(obj, sq_o, 0.0))
    s_noobj = jnp.sum(jnp.where(noobj, sq_o, 0.0))

    # --- class BCE-with-logits (numerically stable), obj-masked ---
    if n_cls > 0:
        x = p[:, 5:]
        y = t[:, 5:]
        bce = (jnp.maximum(x, 0.0) - x * y
               + jnp.log1p(jnp.exp(-jnp.abs(x))))
        s_cls = jnp.sum(jnp.where(obj, bce, 0.0))
    else:
        s_cls = jnp.float32(0.0)

    s_cnt = jnp.sum(jnp.where(obj, 1.0, 0.0))

    # Single unmasked full-vreg accumulator update.
    lane = jax.lax.broadcasted_iota(jnp.int32, (8, 128), 1)
    upd = (jnp.where(lane == 0, s_xy, 0.0)
           + jnp.where(lane == 1, s_wh, 0.0)
           + jnp.where(lane == 2, s_obj, 0.0)
           + jnp.where(lane == 3, s_noobj, 0.0)
           + jnp.where(lane == 4, s_cls, 0.0)
           + jnp.where(lane == 5, s_cnt, 0.0))
    out_ref[...] += upd


def yolo_loss(predictions, targets,
              lambda_coord=LAMBDA_COORD, lambda_noobj=LAMBDA_NOOBJ):
    """Pallas-backed YOLOLoss.forward. Returns (total_loss, components dict)."""
    d = predictions.shape[-1]
    n_cls = d - 5

    pred2d = predictions.reshape(-1, d)               # (N, D): free metadata reshape
    targ2d = targets.reshape(-1, d)
    n = pred2d.shape[0]

    itemsize = max(jnp.dtype(pred2d.dtype).itemsize,
                   jnp.dtype(targ2d.dtype).itemsize)
    tile_rows, num_tiles = _pick_tile_rows(n, d, itemsize)

    kernel = functools.partial(_yolo_loss_kernel,
                               n_rows=n, tile_rows=tile_rows, n_cls=n_cls)

    in_spec = pl.BlockSpec((tile_rows, d), lambda i: (i, 0))
    out_spec = pl.BlockSpec((8, 128), lambda i: (0, 0))

    cost = pl.CostEstimate(
        flops=int(12 * n * d),
        transcendentals=int(n * (2 + 4 + 2 * n_cls)),
        bytes_accessed=int(n * d * (jnp.dtype(pred2d.dtype).itemsize
                                    + jnp.dtype(targ2d.dtype).itemsize)
                           + 8 * 128 * 4),
    )

    partials = pl.pallas_call(
        kernel,
        out_shape=jax.ShapeDtypeStruct((8, 128), jnp.float32),
        grid=(num_tiles,),
        in_specs=[in_spec, in_spec],
        out_specs=out_spec,
        compiler_params=pltpu.CompilerParams(
            dimension_semantics=("arbitrary",),        # output is a resident accumulator
            vmem_limit_bytes=_VMEM_LIMIT_BYTES),
        cost_estimate=cost,
    )(pred2d, targ2d)

    sums = partials[0]                                  # (128,) tiny; lanes 0..5 used
    sum_xy, sum_wh, sum_obj, sum_noobj, sum_cls, cnt_obj = (
        sums[0], sums[1], sums[2], sums[3], sums[4], sums[5])

    n_obj = jnp.maximum(1.0, cnt_obj)                          # max(1, #obj cells)
    n_noobj = jnp.maximum(1.0, jnp.float32(n) - cnt_obj)       # max(1, #noobj cells)

    loss_xy = sum_xy / n_obj
    loss_wh = sum_wh / n_obj
    loss_obj = sum_obj / n_obj
    loss_noobj = sum_noobj / n_noobj
    loss_cls = sum_cls / n_obj

    total = (lambda_coord * (loss_xy + loss_wh) + loss_obj
             + lambda_noobj * loss_noobj + loss_cls)

    # TODO(synk): PyTorch returns Python floats via .item(); we return JAX scalars.
    components = {
        "loss": total,
        "loss_xy": loss_xy,
        "loss_wh": loss_wh,
        "loss_obj": loss_obj,
        "loss_noobj": loss_noobj,
        "loss_cls": loss_cls,
    }
    return total, components


def _yolo_loss_ref(predictions, targets,
                   lambda_coord=LAMBDA_COORD, lambda_noobj=LAMBDA_NOOBJ):
    """Pure-JAX reference mirroring the PyTorch forward (for verification)."""
    p = predictions.astype(jnp.float32)
    t = targets.astype(jnp.float32)
    obj = (t[..., 4:5] > 0).astype(jnp.float32)
    noobj = 1.0 - obj
    n_obj = jnp.maximum(1.0, jnp.sum(obj))
    n_noobj = jnp.maximum(1.0, jnp.sum(noobj))

    loss_xy = jnp.sum(obj * (jax.nn.sigmoid(p[..., 0:2]) - t[..., 0:2]) ** 2) / n_obj
    loss_wh = jnp.sum(obj * (jnp.sqrt(jnp.maximum(p[..., 2:4], 1e-6))
                             - jnp.sqrt(jnp.maximum(t[..., 2:4], 1e-6))) ** 2) / n_obj
    sq = (p[..., 4:5] - t[..., 4:5]) ** 2
    loss_obj = jnp.sum(obj * sq) / n_obj
    loss_noobj = jnp.sum(noobj * sq) / n_noobj
    x, y = p[..., 5:], t[..., 5:]
    bce = jnp.maximum(x, 0.0) - x * y + jnp.log1p(jnp.exp(-jnp.abs(x)))
    loss_cls = jnp.sum(obj * bce) / n_obj
    return (lambda_coord * (loss_xy + loss_wh) + loss_obj
            + lambda_noobj * loss_noobj + loss_cls)


if __name__ == "__main__":
    # small YOLO-style shapes: batch=2, 8x8 grid, 5 box params + 20 classes
    B, S, C = 2, 8, 20
    D = 5 + C
    key = jax.random.PRNGKey(0)
    k1, k2, k3, k4 = jax.random.split(key, 4)

    predictions = jax.random.normal(k1, (B, S, S, D), dtype=jnp.float32)

    targ_xywh = jax.random.uniform(k2, (B, S, S, 4), dtype=jnp.float32)
    targ_obj = (jax.random.uniform(k3, (B, S, S, 1)) > 0.7).astype(jnp.float32)
    targ_cls = (jax.random.uniform(k4, (B, S, S, C)) > 0.9).astype(jnp.float32)
    targets = jnp.concatenate([targ_xywh, targ_obj, targ_cls], axis=-1)

    total, comps = yolo_loss(predictions, targets)
    total = jax.block_until_ready(total)

    ref = jax.block_until_ready(_yolo_loss_ref(predictions, targets))
    assert jnp.allclose(total, ref, rtol=1e-5, atol=1e-5), (total, ref)

    print("KERNEL_OK")
</pallas_src>

<mosaic_0001>
module attributes {stable_mosaic.version = 11 : i64} {
  func.func @_yolo_loss_kernel(%arg0: i32, %arg1: memref<128x25xf32, #tpu.memory_space<vmem>>, %arg2: memref<128x25xf32, #tpu.memory_space<vmem>>, %arg3: memref<8x128xf32, #tpu.memory_space<vmem>>) attributes {dimension_semantics = [#tpu.dimension_semantics<arbitrary>], iteration_bounds = array<i64: 1>, scalar_prefetch = 0 : i64, scratch_operands = 0 : i64, tpu.core_type = #tpu.core_type<tc>, window_params = [{transform_indices = @transform_0, window_bounds = array<i64: 128, 25>}, {transform_indices = @transform_1, window_bounds = array<i64: 128, 25>}, {pipeline_mode = #tpu.pipeline_mode<synchronous>, transform_indices = @transform_2, window_bounds = array<i64: 8, 128>}]} {
    %c0_i32 = arith.constant 0 : i32
    %0 = arith.cmpi eq, %arg0, %c0_i32 : i32
    %1 = arith.extui %0 : i1 to i32
    %c0_i32_0 = arith.constant 0 : i32
    %2 = arith.cmpi ne, %1, %c0_i32_0 : i32
    scf.if %2 {
      %cst_35 = arith.constant 0.000000e+00 : f32
      %133 = vector.broadcast %cst_35 : f32 to vector<8x128xf32>
      %c0_36 = arith.constant 0 : index
      %c0_37 = arith.constant 0 : index
      %134 = vector.load %arg3[%c0_36, %c0_37] : memref<8x128xf32, #tpu.memory_space<vmem>>, vector<8x128xf32>
      tpu.vector_store %arg3[%c0_36, %c0_37], %133 {strides = array<i32>} : memref<8x128xf32, #tpu.memory_space<vmem>>, vector<8x128xf32>,
    } else {
    }
    %c0 = arith.constant 0 : index
    %c0_1 = arith.constant 0 : index
    %3 = vector.load %arg1[%c0, %c0_1] : memref<128x25xf32, #tpu.memory_space<vmem>>, vector<128x25xf32>
    %c0_2 = arith.constant 0 : index
    %c0_3 = arith.constant 0 : index
    %4 = vector.load %arg2[%c0_2, %c0_3] : memref<128x25xf32, #tpu.memory_space<vmem>>, vector<128x25xf32>
    %5 = tpu.iota {dimensions = array<i32: 0>} : vector<128x1xi32>
    %c128_i32 = arith.constant 128 : i32
    %6 = arith.muli %arg0, %c128_i32 : i32
    %7 = vector.broadcast %6 : i32 to vector<128x1xi32>
    %8 = arith.addi %5, %7 : vector<128x1xi32>
    %c128_i32_4 = arith.constant 128 : i32
    %9 = vector.broadcast %c128_i32_4 : i32 to vector<128x1xi32>
    %10 = arith.cmpi slt, %8, %9 : vector<128x1xi32>
    %11 = vector.extract_strided_slice %4 {offsets = [0, 4], sizes = [128, 1], strides = [1, 1]} : vector<128x25xf32> to vector<128x1xf32>
    %cst = arith.constant 0.000000e+00 : f32
    %12 = vector.broadcast %cst : f32 to vector<128x1xf32>
    %13 = arith.cmpf ogt, %11, %12 : vector<128x1xf32>
    %14 = arith.andi %10, %13 : vector<128x1xi1>
    %cst_5 = arith.constant dense<true> : vector<128x1xi1>
    %15 = arith.xori %13, %cst_5 : vector<128x1xi1>
    %16 = arith.andi %10, %15 : vector<128x1xi1>
    %17 = vector.extract_strided_slice %3 {offsets = [0, 0], sizes = [128, 2], strides = [1, 1]} : vector<128x25xf32> to vector<128x2xf32>
    %18 = arith.negf %17 : vector<128x2xf32>
    %19 = math.exp %18 : vector<128x2xf32>
    %cst_6 = arith.constant 1.000000e+00 : f32
    %20 = vector.broadcast %cst_6 : f32 to vector<128x2xf32>
    %21 = arith.addf %20, %19 : vector<128x2xf32>
    %22 = arith.divf %20, %21 : vector<128x2xf32>
    %23 = vector.extract_strided_slice %4 {offsets = [0, 0], sizes = [128, 2], strides = [1, 1]} : vector<128x25xf32> to vector<128x2xf32>
    %24 = arith.subf %22, %23 : vector<128x2xf32>
    %25 = arith.mulf %24, %24 : vector<128x2xf32>
    %cst_7 = arith.constant 0.000000e+00 : f32
    %26 = vector.shape_cast %14 : vector<128x1xi1> to vector<128x1xi1>
    %27 = vector.broadcast %26 : vector<128x1xi1> to vector<128x2xi1>
    %28 = vector.broadcast %cst_7 : f32 to vector<128x2xf32>
    %29 = arith.select %27, %25, %28 : vector<128x2xi1>, vector<128x2xf32>
    %30 = vector.shape_cast %29 : vector<128x2xf32> to vector<1x128x2xf32>
    %cst_8 = arith.constant dense<0.000000e+00> : vector<1xf32>
    %31 = vector.multi_reduction <add>, %30, %cst_8 [1, 2] : vector<1x128x2xf32> to vector<1xf32>
    %32 = vector.shape_cast %31 : vector<1xf32> to vector<1x1x1xf32>
    %33 = vector.extract %32[0, 0, 0] : f32 from vector<1x1x1xf32>
    %34 = vector.extract_strided_slice %3 {offsets = [0, 2], sizes = [128, 2], strides = [1, 1]} : vector<128x25xf32> to vector<128x2xf32>
    %cst_9 = arith.constant 9.99999997E-7 : f32
    %35 = vector.broadcast %cst_9 : f32 to vector<128x2xf32>
    %36 = arith.maximumf %34, %35 : vector<128x2xf32>
    %37 = math.sqrt %36 : vector<128x2xf32>
    %38 = vector.extract_strided_slice %4 {offsets = [0, 2], sizes = [128, 2], strides = [1, 1]} : vector<128x25xf32> to vector<128x2xf32>
    %cst_10 = arith.constant 9.99999997E-7 : f32
    %39 = vector.broadcast %cst_10 : f32 to vector<128x2xf32>
    %40 = arith.maximumf %38, %39 : vector<128x2xf32>
    %41 = math.sqrt %40 : vector<128x2xf32>
    %42 = arith.subf %37, %41 : vector<128x2xf32>
    %43 = arith.mulf %42, %42 : vector<128x2xf32>
    %cst_11 = arith.constant 0.000000e+00 : f32
    %44 = vector.shape_cast %14 : vector<128x1xi1> to vector<128x1xi1>
    %45 = vector.broadcast %44 : vector<128x1xi1> to vector<128x2xi1>
    %46 = vector.broadcast %cst_11 : f32 to vector<128x2xf32>
    %47 = arith.select %45, %43, %46 : vector<128x2xi1>, vector<128x2xf32>
    %48 = vector.shape_cast %47 : vector<128x2xf32> to vector<1x128x2xf32>
    %cst_12 = arith.constant dense<0.000000e+00> : vector<1xf32>
    %49 = vector.multi_reduction <add>, %48, %cst_12 [1, 2] : vector<1x128x2xf32> to vector<1xf32>
    %50 = vector.shape_cast %49 : vector<1xf32> to vector<1x1x1xf32>
    %51 = vector.extract %50[0, 0, 0] : f32 from vector<1x1x1xf32>
    %52 = vector.extract_strided_slice %3 {offsets = [0, 4], sizes = [128, 1], strides = [1, 1]} : vector<128x25xf32> to vector<128x1xf32>
    %53 = arith.subf %52, %11 : vector<128x1xf32>
    %54 = arith.mulf %53, %53 : vector<128x1xf32>
    %cst_13 = arith.constant 0.000000e+00 : f32
    %55 = vector.broadcast %cst_13 : f32 to vector<128x1xf32>
    %56 = arith.select %14, %54, %55 : vector<128x1xi1>, vector<128x1xf32>
    %57 = vector.shape_cast %56 : vector<128x1xf32> to vector<1x128x1xf32>
    %cst_14 = arith.constant dense<0.000000e+00> : vector<1xf32>
    %58 = vector.multi_reduction <add>, %57, %cst_14 [1, 2] : vector<1x128x1xf32> to vector<1xf32>
    %59 = vector.shape_cast %58 : vector<1xf32> to vector<1x1x1xf32>
    %60 = vector.extract %59[0, 0, 0] : f32 from vector<1x1x1xf32>
    %cst_15 = arith.constant 0.000000e+00 : f32
    %61 = vector.broadcast %cst_15 : f32 to vector<128x1xf32>
    %62 = arith.select %16, %54, %61 : vector<128x1xi1>, vector<128x1xf32>
    %63 = vector.shape_cast %62 : vector<128x1xf32> to vector<1x128x1xf32>
    %cst_16 = arith.constant dense<0.000000e+00> : vector<1xf32>
    %64 = vector.multi_reduction <add>, %63, %cst_16 [1, 2] : vector<1x128x1xf32> to vector<1xf32>
    %65 = vector.shape_cast %64 : vector<1xf32> to vector<1x1x1xf32>
    %66 = vector.extract %65[0, 0, 0] : f32 from vector<1x1x1xf32>
    %67 = vector.extract_strided_slice %3 {offsets = [0, 5], sizes = [128, 20], strides = [1, 1]} : vector<128x25xf32> to vector<128x20xf32>
    %68 = vector.extract_strided_slice %4 {offsets = [0, 5], sizes = [128, 20], strides = [1, 1]} : vector<128x25xf32> to vector<128x20xf32>
    %cst_17 = arith.constant 0.000000e+00 : f32
    %69 = vector.broadcast %cst_17 : f32 to vector<128x20xf32>
    %70 = arith.maximumf %67, %69 : vector<128x20xf32>
    %71 = arith.mulf %67, %68 : vector<128x20xf32>
    %72 = arith.subf %70, %71 : vector<128x20xf32>
    %73 = math.absf %67 : vector<128x20xf32>
    %cst_18 = arith.constant 0.000000e+00 : f32
    %74 = vector.broadcast %cst_18 : f32 to vector<128x20xf32>
    %75 = arith.subf %74, %73 : vector<128x20xf32>
    %76 = math.exp %75 : vector<128x20xf32>
    %77 = math.log1p %76 : vector<128x20xf32>
    %78 = arith.addf %72, %77 : vector<128x20xf32>
    %cst_19 = arith.constant 0.000000e+00 : f32
    %79 = vector.shape_cast %14 : vector<128x1xi1> to vector<128x1xi1>
    %80 = vector.broadcast %79 : vector<128x1xi1> to vector<128x20xi1>
    %81 = vector.broadcast %cst_19 : f32 to vector<128x20xf32>
    %82 = arith.select %80, %78, %81 : vector<128x20xi1>, vector<128x20xf32>
    %83 = vector.shape_cast %82 : vector<128x20xf32> to vector<1x128x20xf32>
    %cst_20 = arith.constant dense<0.000000e+00> : vector<1xf32>
    %84 = vector.multi_reduction <add>, %83, %cst_20 [1, 2] : vector<1x128x20xf32> to vector<1xf32>
    %85 = vector.shape_cast %84 : vector<1xf32> to vector<1x1x1xf32>
    %86 = vector.extract %85[0, 0, 0] : f32 from vector<1x1x1xf32>
    %cst_21 = arith.constant 1.000000e+00 : f32
    %cst_22 = arith.constant 0.000000e+00 : f32
    %87 = vector.broadcast %cst_21 : f32 to vector<128x1xf32>
    %88 = vector.broadcast %cst_22 : f32 to vector<128x1xf32>
    %89 = arith.select %14, %87, %88 : vector<128x1xi1>, vector<128x1xf32>
    %90 = vector.shape_cast %89 : vector<128x1xf32> to vector<1x128x1xf32>
    %cst_23 = arith.constant dense<0.000000e+00> : vector<1xf32>
    %91 = vector.multi_reduction <add>, %90, %cst_23 [1, 2] : vector<1x128x1xf32> to vector<1xf32>
    %92 = vector.shape_cast %91 : vector<1xf32> to vector<1x1x1xf32>
    %93 = vector.extract %92[0, 0, 0] : f32 from vector<1x1x1xf32>
    %94 = tpu.iota {dimensions = array<i32: 1>} : vector<8x128xi32>
    %c0_i32_24 = arith.constant 0 : i32
    %95 = vector.broadcast %c0_i32_24 : i32 to vector<8x128xi32>
    %96 = arith.cmpi eq, %94, %95 : vector<8x128xi32>
    %cst_25 = arith.constant 0.000000e+00 : f32
    %97 = vector.broadcast %33 : f32 to vector<8x128xf32>
    %98 = vector.broadcast %cst_25 : f32 to vector<8x128xf32>
    %99 = arith.select %96, %97, %98 : vector<8x128xi1>, vector<8x128xf32>
    %c1_i32 = arith.constant 1 : i32
    %100 = vector.broadcast %c1_i32 : i32 to vector<8x128xi32>
    %101 = arith.cmpi eq, %94, %100 : vector<8x128xi32>
    %cst_26 = arith.constant 0.000000e+00 : f32
    %102 = vector.broadcast %51 : f32 to vector<8x128xf32>
    %103 = vector.broadcast %cst_26 : f32 to vector<8x128xf32>
    %104 = arith.select %101, %102, %103 : vector<8x128xi1>, vector<8x128xf32>
    %105 = arith.addf %99, %104 : vector<8x128xf32>
    %c2_i32 = arith.constant 2 : i32
    %106 = vector.broadcast %c2_i32 : i32 to vector<8x128xi32>
    %107 = arith.cmpi eq, %94, %106 : vector<8x128xi32>
    %cst_27 = arith.constant 0.000000e+00 : f32
    %108 = vector.broadcast %60 : f32 to vector<8x128xf32>
    %109 = vector.broadcast %cst_27 : f32 to vector<8x128xf32>
    %110 = arith.select %107, %108, %109 : vector<8x128xi1>, vector<8x128xf32>
    %111 = arith.addf %105, %110 : vector<8x128xf32>
    %c3_i32 = arith.constant 3 : i32
    %112 = vector.broadcast %c3_i32 : i32 to vector<8x128xi32>
    %113 = arith.cmpi eq, %94, %112 : vector<8x128xi32>
    %cst_28 = arith.constant 0.000000e+00 : f32
    %114 = vector.broadcast %66 : f32 to vector<8x128xf32>
    %115 = vector.broadcast %cst_28 : f32 to vector<8x128xf32>
    %116 = arith.select %113, %114, %115 : vector<8x128xi1>, vector<8x128xf32>
    %117 = arith.addf %111, %116 : vector<8x128xf32>
    %c4_i32 = arith.constant 4 : i32
    %118 = vector.broadcast %c4_i32 : i32 to vector<8x128xi32>
    %119 = arith.cmpi eq, %94, %118 : vector<8x128xi32>
    %cst_29 = arith.constant 0.000000e+00 : f32
    %120 = vector.broadcast %86 : f32 to vector<8x128xf32>
    %121 = vector.broadcast %cst_29 : f32 to vector<8x128xf32>
    %122 = arith.select %119, %120, %121 : vector<8x128xi1>, vector<8x128xf32>
    %123 = arith.addf %117, %122 : vector<8x128xf32>
    %c5_i32 = arith.constant 5 : i32
    %124 = vector.broadcast %c5_i32 : i32 to vector<8x128xi32>
    %125 = arith.cmpi eq, %94, %124 : vector<8x128xi32>
    %cst_30 = arith.constant 0.000000e+00 : f32
    %126 = vector.broadcast %93 : f32 to vector<8x128xf32>
    %127 = vector.broadcast %cst_30 : f32 to vector<8x128xf32>
    %128 = arith.select %125, %126, %127 : vector<8x128xi1>, vector<8x128xf32>
    %129 = arith.addf %123, %128 : vector<8x128xf32>
    %c0_31 = arith.constant 0 : index
    %c0_32 = arith.constant 0 : index
    %130 = vector.load %arg3[%c0_31, %c0_32] : memref<8x128xf32, #tpu.memory_space<vmem>>, vector<8x128xf32>
    %131 = arith.addf %130, %129 : vector<8x128xf32>
    %c0_33 = arith.constant 0 : index
    %c0_34 = arith.constant 0 : index
    %132 = vector.load %arg3[%c0_33, %c0_34] : memref<8x128xf32, #tpu.memory_space<vmem>>, vector<8x128xf32>
    tpu.vector_store %arg3[%c0_33, %c0_34], %131 {strides = array<i32>} : memref<8x128xf32, #tpu.memory_space<vmem>>, vector<8x128xf32>,
    return
  }
  func.func @transform_0(%arg0: i32) -> (i32, i32) {
    %c0_i32 = arith.constant 0 : i32
    %c0_i32_0 = arith.constant 0 : i32
    return %arg0, %c0_i32 : i32, i32
  }
  func.func @transform_1(%arg0: i32) -> (i32, i32) {
    %c0_i32 = arith.constant 0 : i32
    %c0_i32_0 = arith.constant 0 : i32
    return %arg0, %c0_i32 : i32, i32
  }
  func.func @transform_2(%arg0: i32) -> (i32, i32) {
    %c0_i32 = arith.constant 0 : i32
    %c0_i32_0 = arith.constant 0 : i32
    %c0_i32_1 = arith.constant 0 : i32
    return %c0_i32, %c0_i32_0 : i32, i32
  }
}

</mosaic_0001>

<llo_original>
// kernel: tpu_custom_call.1
$region0: #{tpu_custom_call.1}
  #allocation0 [shape = 'u32[]', space=smem, size = 0x4, offset = 0x4, fixed_abs, tag = 'smem constant byte address 0x4 - core index']
  #allocation1 [shape = 'u32[144,128]{1,0:T(1,128)}', space=vmem, size = 0x12000, scoped, tag = 'internal scratch']
  %s0 = inlined_call_operand.vmem [shape: f32[128,25], index: 0, kind: input, shape index: {}]
  %s1 = inlined_call_operand.vmem [shape: f32[128,25], index: 1, kind: input, shape index: {}]
  %s2 = inlined_call_operand.hbm [shape: f32[8,128], index: 2, kind: output, shape index: {}]
  %s3 = sld [smem:[#allocation0]]
  $region22: #{tpu_custom_call.1} parent=0
    _
  %s5 = ssub.s32 1, %s3
  %s6 = scalar_select 0, %s5, %s3
  $region1: #{tpu_custom_call.1} parent=0
    #allocation2 [shape = 'u8[4096]{0}', space=vmem, size = 0x1000, scoped, tag = 'output window, operand 0, single buffered']
    #allocation3 [shape = 's32[1]{0}', space=sflag, size = 0x4, scoped, tag = 'scoped memory for tpu_custom_call.1']
    %7 = vsyncpa [#allocation3], 0
    // Predicated region
    $region2: #{tpu_custom_call.1} parent=1 // pred_check
      _
    $region3: #{tpu_custom_call.1} parent=1 // pred_check_branch
      %9 = sbr.rel (0) target = $region5
    $region4: #{tpu_custom_call.1} parent=1 // pred_region
      _
    $region5: #{tpu_custom_call.1} parent=1 // pred_fallthru
      _
    // Predicated region
    $region6: #{tpu_custom_call.1} parent=1 // pred_check
      _
    $region7: #{tpu_custom_call.1} parent=1 // pred_check_branch
      %11 = sbr.rel (0) target = $region9
    $region8: #{tpu_custom_call.1} parent=1 // pred_region
      _
    $region9: #{tpu_custom_call.1} parent=1 // pred_fallthru
      _
    %p12 = scmp.eq.s32.totalorder 0, 0
    // Predicated region
    $region10: #{tpu_custom_call.1} parent=1 // pred_check
      %p13 = pneg %p12
    $region11: #{tpu_custom_call.1} parent=1 // pred_check_branch
      %15 = sbr.rel (%p13) target = $region13
    $region12: #{tpu_custom_call.1} parent=1 // pred_region
      %16 = vst [vmem:[#allocation2] sm:$0xff] 0.0
    $region13: #{tpu_custom_call.1} parent=1 // pred_fallthru
      _
    %v17 = vld [vmem:[%s0] sm:$0xff]
    %v18 = vld [vmem:[%s0 + $0x8] sm:$0xff]
    %v19 = vld [vmem:[%s0 + $0x10] sm:$0xff]
    %v20 = vld [vmem:[%s0 + $0x18] sm:$0xff]
    %v21 = vld [vmem:[%s0 + $0x20] sm:$0xff]
    %v22 = vld [vmem:[%s0 + $0x28] sm:$0xff]
    %v23 = vld [vmem:[%s0 + $0x30] sm:$0xff]
    %v24 = vld [vmem:[%s0 + $0x38] sm:$0xff]
    %v25 = vld [vmem:[%s0 + $0x40] sm:$0xff]
    %v26 = vld [vmem:[%s0 + $0x48] sm:$0xff]
    %v27 = vld [vmem:[%s0 + $0x50] sm:$0xff]
    %v28 = vld [vmem:[%s0 + $0x58] sm:$0xff]
    %v29 = vld [vmem:[%s0 + $0x60] sm:$0xff]
    %v30 = vld [vmem:[%s0 + $0x68] sm:$0xff]
    %v31 = vld [vmem:[%s0 + $0x70] sm:$0xff]
    %v32 = vld [vmem:[%s0 + $0x78] sm:$0xff]
    %v33 = vld [vmem:[%s1] sm:$0xff]
    %v34 = vld [vmem:[%s1 + $0x8] sm:$0xff]
    %v35 = vld [vmem:[%s1 + $0x10] sm:$0xff]
    %v36 = vld [vmem:[%s1 + $0x18] sm:$0xff]
    %v37 = vld [vmem:[%s1 + $0x20] sm:$0xff]
    %v38 = vld [vmem:[%s1 + $0x28] sm:$0xff]
    %v39 = vld [vmem:[%s1 + $0x30] sm:$0xff]
    %v40 = vld [vmem:[%s1 + $0x38] sm:$0xff]
    %v41 = vld [vmem:[%s1 + $0x40] sm:$0xff]
    %v42 = vld [vmem:[%s1 + $0x48] sm:$0xff]
    %v43 = vld [vmem:[%s1 + $0x50] sm:$0xff]
    %v44 = vld [vmem:[%s1 + $0x58] sm:$0xff]
    %v45 = vld [vmem:[%s1 + $0x60] sm:$0xff]
    %v46 = vld [vmem:[%s1 + $0x68] sm:$0xff]
    %v47 = vld [vmem:[%s1 + $0x70] sm:$0xff]
    %v48 = vld [vmem:[%s1 + $0x78] sm:$0xff]
    %v49 = vlaneseq
    %v50 = vshrl.u32 %v49, 7
    %v51 = vadd.s32 %v50, 8
    %v52 = vadd.s32 %v50, 16
    %v53 = vadd.s32 %v50, 24
    %v54 = vadd.s32 %v50, 32
    %v55 = vadd.s32 %v50, 40
    %v56 = vadd.s32 %v50, 48
    %v57 = vadd.s32 %v50, 56
    %v58 = vadd.s32 %v50, 64
    %v59 = vadd.s32 %v50, 72
    %v60 = vadd.s32 %v50, 80
    %v61 = vadd.s32 %v50, 88
    %v62 = vadd.s32 %v50, 96
    %v63 = vadd.s32 %v50, 104
    %v64 = vadd.s32 %v50, 112
    %v65 = vadd.s32 %v50, 120
    %s66 = smul.u32 0, 128
    %v67 = vstv %s66
    %v68 = vadd.s32 %v50, %v67
    %v69 = vadd.s32 %v51, %v67
    %v70 = vadd.s32 %v52, %v67
    %v71 = vadd.s32 %v53, %v67
    %v72 = vadd.s32 %v54, %v67
    %v73 = vadd.s32 %v55, %v67
    %v74 = vadd.s32 %v56, %v67
    %v75 = vadd.s32 %v57, %v67
    %v76 = vadd.s32 %v58, %v67
    %v77 = vadd.s32 %v59, %v67
    %v78 = vadd.s32 %v60, %v67
    %v79 = vadd.s32 %v61, %v67
    %v80 = vadd.s32 %v62, %v67
    %v81 = vadd.s32 %v63, %v67
    %v82 = vadd.s32 %v64, %v67
    %v83 = vadd.s32 %v65, %v67
    %vm84 = vcmp.lt.s32.totalorder %v68, 128
    %vm85 = vcmp.lt.s32.totalorder %v69, 128
    %vm86 = vcmp.lt.s32.totalorder %v70, 128
    %vm87 = vcmp.lt.s32.totalorder %v71, 128
    %vm88 = vcmp.lt.s32.totalorder %v72, 128
    %vm89 = vcmp.lt.s32.totalorder %v73, 128
    %vm90 = vcmp.lt.s32.totalorder %v74, 128
    %vm91 = vcmp.lt.s32.totalorder %v75, 128
    %vm92 = vcmp.lt.s32.totalorder %v76, 128
    %vm93 = vcmp.lt.s32.totalorder %v77, 128
    %vm94 = vcmp.lt.s32.totalorder %v78, 128
    %vm95 = vcmp.lt.s32.totalorder %v79, 128
    %vm96 = vcmp.lt.s32.totalorder %v80, 128
    %vm97 = vcmp.lt.s32.totalorder %v81, 128
    %vm98 = vcmp.lt.s32.totalorder %v82, 128
    %vm99 = vcmp.lt.s32.totalorder %v83, 128
    %vm100 = vcmp.gt.f32.partialorder %v33, 0.0
    %vm101 = vcmp.gt.f32.partialorder %v34, 0.0
    %vm102 = vcmp.gt.f32.partialorder %v35, 0.0
    %vm103 = vcmp.gt.f32.partialorder %v36, 0.0
    %vm104 = vcmp.gt.f32.partialorder %v37, 0.0
    %vm105 = vcmp.gt.f32.partialorder %v38, 0.0
    %vm106 = vcmp.gt.f32.partialorder %v39, 0.0
    %vm107 = vcmp.gt.f32.partialorder %v40, 0.0
    %vm108 = vcmp.gt.f32.partialorder %v41, 0.0
    %vm109 = vcmp.gt.f32.partialorder %v42, 0.0
    %vm110 = vcmp.gt.f32.partialorder %v43, 0.0
    %vm111 = vcmp.gt.f32.partialorder %v44, 0.0
    %vm112 = vcmp.gt.f32.partialorder %v45, 0.0
    %vm113 = vcmp.gt.f32.partialorder %v46, 0.0
    %vm114 = vcmp.gt.f32.partialorder %v47, 0.0
    %vm115 = vcmp.gt.f32.partialorder %v48, 0.0
    %vm116 = vmand %vm84, %vm100
    %vm117 = vmand %vm85, %vm101
    %vm118 = vmand %vm86, %vm102
    %vm119 = vmand %vm87, %vm103
    %vm120 = vmand %vm88, %vm104
    %vm121 = vmand %vm89, %vm105
    %vm122 = vmand %vm90, %vm106
    %vm123 = vmand %vm91, %vm107
    %vm124 = vmand %vm92, %vm108
    %vm125 = vmand %vm93, %vm109
    %vm126 = vmand %vm94, %vm110
    %vm127 = vmand %vm95, %vm111
    %vm128 = vmand %vm96, %vm112
    %vm129 = vmand %vm97, %vm113
    %vm130 = vmand %vm98, %vm114
    %vm131 = vmand %vm99, %vm115
    %vm132 = vmxor %vm100, 1
    %vm133 = vmxor %vm101, 1
    %vm134 = vmxor %vm102, 1
    %vm135 = vmxor %vm103, 1
    %vm136 = vmxor %vm104, 1
    %vm137 = vmxor %vm105, 1
    %vm138 = vmxor %vm106, 1
    %vm139 = vmxor %vm107, 1
    %vm140 = vmxor %vm108, 1
    %vm141 = vmxor %vm109, 1
    %vm142 = vmxor %vm110, 1
    %vm143 = vmxor %vm111, 1
    %vm144 = vmxor %vm112, 1
    %vm145 = vmxor %vm113, 1
    %vm146 = vmxor %vm114, 1
    %vm147 = vmxor %vm115, 1
    %vm148 = vmand %vm84, %vm132
    %vm149 = vmand %vm85, %vm133
    %vm150 = vmand %vm86, %vm134
    %vm151 = vmand %vm87, %vm135
    %vm152 = vmand %vm88, %vm136
    %vm153 = vmand %vm89, %vm137
    %vm154 = vmand %vm90, %vm138
    %vm155 = vmand %vm91, %vm139
    %vm156 = vmand %vm92, %vm140
    %vm157 = vmand %vm93, %vm141
    %vm158 = vmand %vm94, %vm142
    %vm159 = vmand %vm95, %vm143
    %vm160 = vmand %vm96, %vm144
    %vm161 = vmand %vm97, %vm145
    %vm162 = vmand %vm98, %vm146
    %vm163 = vmand %vm99, %vm147
    %v164 = vxor.u32 %v17, 2147483648
    %v165 = vxor.u32 %v18, 2147483648
    %v166 = vxor.u32 %v19, 2147483648
    %v167 = vxor.u32 %v20, 2147483648
    %v168 = vxor.u32 %v21, 2147483648
    %v169 = vxor.u32 %v22, 2147483648
    %v170 = vxor.u32 %v23, 2147483648
    %v171 = vxor.u32 %v24, 2147483648
    %v172 = vxor.u32 %v25, 2147483648
    %v173 = vxor.u32 %v26, 2147483648
    %v174 = vxor.u32 %v27, 2147483648
    %v175 = vxor.u32 %v28, 2147483648
    %v176 = vxor.u32 %v29, 2147483648
    %v177 = vxor.u32 %v30, 2147483648
    %v178 = vxor.u32 %v31, 2147483648
    %v179 = vxor.u32 %v32, 2147483648
    %v180 = vmul.f32 %v164, 1.442695
    %v181 = vpow.pop %v180
    %v182 = vmul.f32 %v165, 1.442695
    %v183 = vpow.pop %v182
    %v184 = vmul.f32 %v166, 1.442695
    %v185 = vpow.pop %v184
    %v186 = vmul.f32 %v167, 1.442695
    %v187 = vpow.pop %v186
    %v188 = vmul.f32 %v168, 1.442695
    %v189 = vpow.pop %v188
    %v190 = vmul.f32 %v169, 1.442695
    %v191 = vpow.pop %v190
    %v192 = vmul.f32 %v170, 1.442695
    %v193 = vpow.pop %v192
    %v194 = vmul.f32 %v171, 1.442695
    %v195 = vpow.pop %v194
    %v196 = vmul.f32 %v172, 1.442695
    %v197 = vpow.pop %v196
    %v198 = vmul.f32 %v173, 1.442695
    %v199 = vpow.pop %v198
    %v200 = vmul.f32 %v174, 1.442695
    %v201 = vpow.pop %v200
    %v202 = vmul.f32 %v175, 1.442695
    %v203 = vpow.pop %v202
    %v204 = vmul.f32 %v176, 1.442695
    %v205 = vpow.pop %v204
    %v206 = vmul.f32 %v177, 1.442695
    %v207 = vpow.pop %v206
    %v208 = vmul.f32 %v178, 1.442695
    %v209 = vpow.pop %v208
    %v210 = vmul.f32 %v179, 1.442695
    %v211 = vpow.pop %v210
    %v212 = vadd.f32 %v181, 1.0
    %v213 = vadd.f32 %v183, 1.0
    %v214 = vadd.f32 %v185, 1.0
    %v215 = vadd.f32 %v187, 1.0
    %v216 = vadd.f32 %v189, 1.0
    %v217 = vadd.f32 %v191, 1.0
    %v218 = vadd.f32 %v193, 1.0
    %v219 = vadd.f32 %v195, 1.0
    %v220 = vadd.f32 %v197, 1.0
    %v221 = vadd.f32 %v199, 1.0
    %v222 = vadd.f32 %v201, 1.0
    %v223 = vadd.f32 %v203, 1.0
    %v224 = vadd.f32 %v205, 1.0
    %v225 = vadd.f32 %v207, 1.0
    %v226 = vadd.f32 %v209, 1.0
    %v227 = vadd.f32 %v211, 1.0
    %v228 = vrcp.pop %v212
    %v229 = vmul.f32 1.0, %v228
    %v230 = vrcp.pop %v213
    %v231 = vmul.f32 1.0, %v230
    %v232 = vrcp.pop %v214
    %v233 = vmul.f32 1.0, %v232
    %v234 = vrcp.pop %v215
    %v235 = vmul.f32 1.0, %v234
    %v236 = vrcp.pop %v216
    %v237 = vmul.f32 1.0, %v236
    %v238 = vrcp.pop %v217
    %v239 = vmul.f32 1.0, %v238
    %v240 = vrcp.pop %v218
    %v241 = vmul.f32 1.0, %v240
    %v242 = vrcp.pop %v219
    %v243 = vmul.f32 1.0, %v242
    %v244 = vrcp.pop %v220
    %v245 = vmul.f32 1.0, %v244
    %v246 = vrcp.pop %v221
    %v247 = vmul.f32 1.0, %v246
    %v248 = vrcp.pop %v222
    %v249 = vmul.f32 1.0, %v248
    %v250 = vrcp.pop %v223
    %v251 = vmul.f32 1.0, %v250
    %v252 = vrcp.pop %v224
    %v253 = vmul.f32 1.0, %v252
    %v254 = vrcp.pop %v225
    %v255 = vmul.f32 1.0, %v254
    %v256 = vrcp.pop %v226
    %v257 = vmul.f32 1.0, %v256
    %v258 = vrcp.pop %v227
    %v259 = vmul.f32 1.0, %v258
    %v260 = vsub.f32 %v229, %v33
    %v261 = vsub.f32 %v231, %v34
    %v262 = vsub.f32 %v233, %v35
    %v263 = vsub.f32 %v235, %v36
    %v264 = vsub.f32 %v237, %v37
    %v265 = vsub.f32 %v239, %v38
    %v266 = vsub.f32 %v241, %v39
    %v267 = vsub.f32 %v243, %v40
    %v268 = vsub.f32 %v245, %v41
    %v269 = vsub.f32 %v247, %v42
    %v270 = vsub.f32 %v249, %v43
    %v271 = vsub.f32 %v251, %v44
    %v272 = vsub.f32 %v253, %v45
    %v273 = vsub.f32 %v255, %v46
    %v274 = vsub.f32 %v257, %v47
    %v275 = vsub.f32 %v259, %v48
    %v276 = vmul.f32 %v260, %v260
    %v277 = vmul.f32 %v261, %v261
    %v278 = vmul.f32 %v262, %v262
    %v279 = vmul.f32 %v263, %v263
    %v280 = vmul.f32 %v264, %v264
    %v281 = vmul.f32 %v265, %v265
    %v282 = vmul.f32 %v266, %v266
    %v283 = vmul.f32 %v267, %v267
    %v284 = vmul.f32 %v268, %v268
    %v285 = vmul.f32 %v269, %v269
    %v286 = vmul.f32 %v270, %v270
    %v287 = vmul.f32 %v271, %v271
    %v288 = vmul.f32 %v272, %v272
    %v289 = vmul.f32 %v273, %v273
    %v290 = vmul.f32 %v274, %v274
    %v291 = vmul.f32 %v275, %v275
    %v292 = vsel %vm116, 1, 0
    %v293 = vsel %vm117, 1, 0
    %v294 = vsel %vm118, 1, 0
    %v295 = vsel %vm119, 1, 0
    %v296 = vsel %vm120, 1, 0
    %v297 = vsel %vm121, 1, 0
    %v298 = vsel %vm122, 1, 0
    %v299 = vsel %vm123, 1, 0
    %v300 = vsel %vm124, 1, 0
    %v301 = vsel %vm125, 1, 0
    %v302 = vsel %vm126, 1, 0
    %v303 = vsel %vm127, 1, 0
    %v304 = vsel %vm128, 1, 0
    %v305 = vsel %vm129, 1, 0
    %v306 = vsel %vm130, 1, 0
    %v307 = vsel %vm131, 1, 0
    %308 = vset.pattern.permute.xlu0 4
    %309 = vperm.xlu0 %308, %v292
    %v310 = vpop.permute.xlu0 %309
    %311 = vset.pattern.permute.xlu0 4
    %312 = vperm.xlu0 %311, %v293
    %v313 = vpop.permute.xlu0 %312
    %314 = vset.pattern.permute.xlu0 4
    %315 = vperm.xlu0 %314, %v294
    %v316 = vpop.permute.xlu0 %315
    %317 = vset.pattern.permute.xlu0 4
    %318 = vperm.xlu0 %317, %v295
    %v319 = vpop.permute.xlu0 %318
    %320 = vset.pattern.permute.xlu0 4
    %321 = vperm.xlu0 %320, %v296
    %v322 = vpop.permute.xlu0 %321
    %323 = vset.pattern.permute.xlu0 4
    %324 = vperm.xlu0 %323, %v297
    %v325 = vpop.permute.xlu0 %324
    %326 = vset.pattern.permute.xlu0 4
    %327 = vperm.xlu0 %326, %v298
    %v328 = vpop.permute.xlu0 %327
    %329 = vset.pattern.permute.xlu0 4
    %330 = vperm.xlu0 %329, %v299
    %v331 = vpop.permute.xlu0 %330
    %332 = vset.pattern.permute.xlu0 4
    %333 = vperm.xlu0 %332, %v300
    %v334 = vpop.permute.xlu0 %333
    %335 = vset.pattern.permute.xlu0 4
    %336 = vperm.xlu0 %335, %v301
    %v337 = vpop.permute.xlu0 %336
    %338 = vset.pattern.permute.xlu0 4
    %339 = vperm.xlu0 %338, %v302
    %v340 = vpop.permute.xlu0 %339
    %341 = vset.pattern.permute.xlu0 4
    %342 = vperm.xlu0 %341, %v303
    %v343 = vpop.permute.xlu0 %342
    %344 = vset.pattern.permute.xlu0 4
    %345 = vperm.xlu0 %344, %v304
    %v346 = vpop.permute.xlu0 %345
    %347 = vset.pattern.permute.xlu0 4
    %348 = vperm.xlu0 %347, %v305
    %v349 = vpop.permute.xlu0 %348
    %350 = vset.pattern.permute.xlu0 4
    %351 = vperm.xlu0 %350, %v306
    %v352 = vpop.permute.xlu0 %351
    %353 = vset.pattern.permute.xlu0 4
    %354 = vperm.xlu0 %353, %v307
    %v355 = vpop.permute.xlu0 %354
    %vm356 = vcmp.eq.s32.totalorder %v310, 1
    %vm357 = vcmp.eq.s32.totalorder %v313, 1
    %vm358 = vcmp.eq.s32.totalorder %v316, 1
    %vm359 = vcmp.eq.s32.totalorder %v319, 1
    %vm360 = vcmp.eq.s32.totalorder %v322, 1
    %vm361 = vcmp.eq.s32.totalorder %v325, 1
    %vm362 = vcmp.eq.s32.totalorder %v328, 1
    %vm363 = vcmp.eq.s32.totalorder %v331, 1
    %vm364 = vcmp.eq.s32.totalorder %v334, 1
    %vm365 = vcmp.eq.s32.totalorder %v337, 1
    %vm366 = vcmp.eq.s32.totalorder %v340, 1
    %vm367 = vcmp.eq.s32.totalorder %v343, 1
    %vm368 = vcmp.eq.s32.totalorder %v346, 1
    %vm369 = vcmp.eq.s32.totalorder %v349, 1
    %vm370 = vcmp.eq.s32.totalorder %v352, 1
    %vm371 = vcmp.eq.s32.totalorder %v355, 1
    %v372 = vsel %vm356, %v276, 0.0
    %v373 = vsel %vm357, %v277, 0.0
    %v374 = vsel %vm358, %v278, 0.0
    %v375 = vsel %vm359, %v279, 0.0
    %v376 = vsel %vm360, %v280, 0.0
    %v377 = vsel %vm361, %v281, 0.0
    %v378 = vsel %vm362, %v282, 0.0
    %v379 = vsel %vm363, %v283, 0.0
    %v380 = vsel %vm364, %v284, 0.0
    %v381 = vsel %vm365, %v285, 0.0
    %v382 = vsel %vm366, %v286, 0.0
    %v383 = vsel %vm367, %v287, 0.0
    %v384 = vsel %vm368, %v288, 0.0
    %v385 = vsel %vm369, %v289, 0.0
    %v386 = vsel %vm370, %v290, 0.0
    %v387 = vsel %vm371, %v291, 0.0
    %vm388 = vcmask 15360
    %v389 = vsel %vm388, %v372, 0.0
    %v390 = vsel %vm388, %v373, 0.0
    %v391 = vadd.f32 %v389, %v390
    %v392 = vsel %vm388, %v374, 0.0
    %v393 = vadd.f32 %v391, %v392
    %v394 = vsel %vm388, %v375, 0.0
    %v395 = vadd.f32 %v393, %v394
    %v396 = vsel %vm388, %v376, 0.0
    %v397 = vadd.f32 %v395, %v396
    %v398 = vsel %vm388, %v377, 0.0
    %v399 = vadd.f32 %v397, %v398
    %v400 = vsel %vm388, %v378, 0.0
    %v401 = vadd.f32 %v399, %v400
    %v402 = vsel %vm388, %v379, 0.0
    %v403 = vadd.f32 %v401, %v402
    %v404 = vsel %vm388, %v380, 0.0
    %v405 = vadd.f32 %v403, %v404
    %v406 = vsel %vm388, %v381, 0.0
    %v407 = vadd.f32 %v405, %v406
    %v408 = vsel %vm388, %v382, 0.0
    %v409 = vadd.f32 %v407, %v408
    %v410 = vsel %vm388, %v383, 0.0
    %v411 = vadd.f32 %v409, %v410
    %v412 = vsel %vm388, %v384, 0.0
    %v413 = vadd.f32 %v411, %v412
    %v414 = vsel %vm388, %v385, 0.0
    %v415 = vadd.f32 %v413, %v414
    %v416 = vsel %vm388, %v386, 0.0
    %v417 = vadd.f32 %v415, %v416
    %v418 = vsel %vm388, %v387, 0.0
    %v419 = vadd.f32 %v417, %v418
    %420 = vadd.xlane.f32.xlu0 %v419
    %v421 = vpop.xlane.xlu0 %420
    %v422 = vrot.slane %v421, 4
    %v423 = vadd.f32 %v421, %v422
    %v424 = vrot.slane %v423, 2
    %v425 = vadd.f32 %v423, %v424
    %v426 = vrot.slane %v425, 1
    %v427 = vadd.f32 %v425, %v426
    %s428 = vtos %v427
    %v429 = vmax.f32 %v17, 1e-06
    %v430 = vmax.f32 %v18, 1e-06
    %v431 = vmax.f32 %v19, 1e-06
    %v432 = vmax.f32 %v20, 1e-06
    %v433 = vmax.f32 %v21, 1e-06
    %v434 = vmax.f32 %v22, 1e-06
    %v435 = vmax.f32 %v23, 1e-06
    %v436 = vmax.f32 %v24, 1e-06
    %v437 = vmax.f32 %v25, 1e-06
    %v438 = vmax.f32 %v26, 1e-06
    %v439 = vmax.f32 %v27, 1e-06
    %v440 = vmax.f32 %v28, 1e-06
    %v441 = vmax.f32 %v29, 1e-06
    %v442 = vmax.f32 %v30, 1e-06
    %v443 = vmax.f32 %v31, 1e-06
    %v444 = vmax.f32 %v32, 1e-06
    %v445 = vrsqrt.pop %v429
    %v446 = vmul.f32 %v429, %v445
    %vm447 = vcmp.eq.f32.partialorder %v429, inf
    %v448 = vsel %vm447, %v429, %v446
    %vm449 = vcmp.eq.f32.partialorder %v429, 0.0
    %v450 = vand.u32 %v429, 2147483648
    %v451 = vsel %vm449, %v450, %v448
    %v452 = vrsqrt.pop %v430
    %v453 = vmul.f32 %v430, %v452
    %vm454 = vcmp.eq.f32.partialorder %v430, inf
    %v455 = vsel %vm454, %v430, %v453
    %vm456 = vcmp.eq.f32.partialorder %v430, 0.0
    %v457 = vand.u32 %v430, 2147483648
    %v458 = vsel %vm456, %v457, %v455
    %v459 = vrsqrt.pop %v431
    %v460 = vmul.f32 %v431, %v459
    %vm461 = vcmp.eq.f32.partialorder %v431, inf
    %v462 = vsel %vm461, %v431, %v460
    %vm463 = vcmp.eq.f32.partialorder %v431, 0.0
    %v464 = vand.u32 %v431, 2147483648
    %v465 = vsel %vm463, %v464, %v462
    %v466 = vrsqrt.pop %v432
    %v467 = vmul.f32 %v432, %v466
    %vm468 = vcmp.eq.f32.partialorder %v432, inf
    %v469 = vsel %vm468, %v432, %v467
    %vm470 = vcmp.eq.f32.partialorder %v432, 0.0
    %v471 = vand.u32 %v432, 2147483648
    %v472 = vsel %vm470, %v471, %v469
    %v473 = vrsqrt.pop %v433
    %v474 = vmul.f32 %v433, %v473
    %vm475 = vcmp.eq.f32.partialorder %v433, inf
    %v476 = vsel %vm475, %v433, %v474
    %vm477 = vcmp.eq.f32.partialorder %v433, 0.0
    %v478 = vand.u32 %v433, 2147483648
    %v479 = vsel %vm477, %v478, %v476
    %v480 = vrsqrt.pop %v434
    %v481 = vmul.f32 %v434, %v480
    %vm482 = vcmp.eq.f32.partialorder %v434, inf
    %v483 = vsel %vm482, %v434, %v481
    %vm484 = vcmp.eq.f32.partialorder %v434, 0.0
    %v485 = vand.u32 %v434, 2147483648
    %v486 = vsel %vm484, %v485, %v483
    %v487 = vrsqrt.pop %v435
    %v488 = vmul.f32 %v435, %v487
    %vm489 = vcmp.eq.f32.partialorder %v435, inf
    %v490 = vsel %vm489, %v435, %v488
    %vm491 = vcmp.eq.f32.partialorder %v435, 0.0
    %v492 = vand.u32 %v435, 2147483648
    %v493 = vsel %vm491, %v492, %v490
    %v494 = vrsqrt.pop %v436
    %v495 = vmul.f32 %v436, %v494
    %vm496 = vcmp.eq.f32.partialorder %v436, inf
    %v497 = vsel %vm496, %v436, %v495
    %vm498 = vcmp.eq.f32.partialorder %v436, 0.0
    %v499 = vand.u32 %v436, 2147483648
    %v500 = vsel %vm498, %v499, %v497
    %v501 = vrsqrt.pop %v437
    %v502 = vmul.f32 %v437, %v501
    %vm503 = vcmp.eq.f32.partialorder %v437, inf
    %v504 = vsel %vm503, %v437, %v502
    %vm505 = vcmp.eq.f32.partialorder %v437, 0.0
    %v506 = vand.u32 %v437, 2147483648
    %v507 = vsel %vm505, %v506, %v504
    %v508 = vrsqrt.pop %v438
    %v509 = vmul.f32 %v438, %v508
    %vm510 = vcmp.eq.f32.partialorder %v438, inf
    %v511 = vsel %vm510, %v438, %v509
    %vm512 = vcmp.eq.f32.partialorder %v438, 0.0
    %v513 = vand.u32 %v438, 2147483648
    %v514 = vsel %vm512, %v513, %v511
    %v515 = vrsqrt.pop %v439
    %v516 = vmul.f32 %v439, %v515
    %vm517 = vcmp.eq.f32.partialorder %v439, inf
    %v518 = vsel %vm517, %v439, %v516
    %vm519 = vcmp.eq.f32.partialorder %v439, 0.0
    %v520 = vand.u32 %v439, 2147483648
    %v521 = vsel %vm519, %v520, %v518
    %v522 = vrsqrt.pop %v440
    %v523 = vmul.f32 %v440, %v522
    %vm524 = vcmp.eq.f32.partialorder %v440, inf
    %v525 = vsel %vm524, %v440, %v523
    %vm526 = vcmp.eq.f32.partialorder %v440, 0.0
    %v527 = vand.u32 %v440, 2147483648
    %v528 = vsel %vm526, %v527, %v525
    %v529 = vrsqrt.pop %v441
    %v530 = vmul.f32 %v441, %v529
    %vm531 = vcmp.eq.f32.partialorder %v441, inf
    %v532 = vsel %vm531, %v441, %v530
    %vm533 = vcmp.eq.f32.partialorder %v441, 0.0
    %v534 = vand.u32 %v441, 2147483648
    %v535 = vsel %vm533, %v534, %v532
    %v536 = vrsqrt.pop %v442
    %v537 = vmul.f32 %v442, %v536
    %vm538 = vcmp.eq.f32.partialorder %v442, inf
    %v539 = vsel %vm538, %v442, %v537
    %vm540 = vcmp.eq.f32.partialorder %v442, 0.0
    %v541 = vand.u32 %v442, 2147483648
    %v542 = vsel %vm540, %v541, %v539
    %v543 = vrsqrt.pop %v443
    %v544 = vmul.f32 %v443, %v543
    %vm545 = vcmp.eq.f32.partialorder %v443, inf
    %v546 = vsel %vm545, %v443, %v544
    %vm547 = vcmp.eq.f32.partialorder %v443, 0.0
    %v548 = vand.u32 %v443, 2147483648
    %v549 = vsel %vm547, %v548, %v546
    %v550 = vrsqrt.pop %v444
    %v551 = vmul.f32 %v444, %v550
    %vm552 = vcmp.eq.f32.partialorder %v444, inf
    %v553 = vsel %vm552, %v444, %v551
    %vm554 = vcmp.eq.f32.partialorder %v444, 0.0
    %v555 = vand.u32 %v444, 2147483648
    %v556 = vsel %vm554, %v555, %v553
    %v557 = vmax.f32 %v33, 1e-06
    %v558 = vmax.f32 %v34, 1e-06
    %v559 = vmax.f32 %v35, 1e-06
    %v560 = vmax.f32 %v36, 1e-06
    %v561 = vmax.f32 %v37, 1e-06
    %v562 = vmax.f32 %v38, 1e-06
    %v563 = vmax.f32 %v39, 1e-06
    %v564 = vmax.f32 %v40, 1e-06
    %v565 = vmax.f32 %v41, 1e-06
    %v566 = vmax.f32 %v42, 1e-06
    %v567 = vmax.f32 %v43, 1e-06
    %v568 = vmax.f32 %v44, 1e-06
    %v569 = vmax.f32 %v45, 1e-06
    %v570 = vmax.f32 %v46, 1e-06
    %v571 = vmax.f32 %v47, 1e-06
    %v572 = vmax.f32 %v48, 1e-06
    %v573 = vrsqrt.pop %v557
    %v574 = vmul.f32 %v557, %v573
    %vm575 = vcmp.eq.f32.partialorder %v557, inf
    %v576 = vsel %vm575, %v557, %v574
    %vm577 = vcmp.eq.f32.partialorder %v557, 0.0
    %v578 = vand.u32 %v557, 2147483648
    %v579 = vsel %vm577, %v578, %v576
    %v580 = vrsqrt.pop %v558
    %v581 = vmul.f32 %v558, %v580
    %vm582 = vcmp.eq.f32.partialorder %v558, inf
    %v583 = vsel %vm582, %v558, %v581
    %vm584 = vcmp.eq.f32.partialorder %v558, 0.0
    %v585 = vand.u32 %v558, 2147483648
    %v586 = vsel %vm584, %v585, %v583
    %v587 = vrsqrt.pop %v559
    %v588 = vmul.f32 %v559, %v587
    %vm589 = vcmp.eq.f32.partialorder %v559, inf
    %v590 = vsel %vm589, %v559, %v588
    %vm591 = vcmp.eq.f32.partialorder %v559, 0.0
    %v592 = vand.u32 %v559, 2147483648
    %v593 = vsel %vm591, %v592, %v590
    %v594 = vrsqrt.pop %v560
    %v595 = vmul.f32 %v560, %v594
    %vm596 = vcmp.eq.f32.partialorder %v560, inf
    %v597 = vsel %vm596, %v560, %v595
    %vm598 = vcmp.eq.f32.partialorder %v560, 0.0
    %v599 = vand.u32 %v560, 2147483648
    %v600 = vsel %vm598, %v599, %v597
    %v601 = vrsqrt.pop %v561
    %v602 = vmul.f32 %v561, %v601
    %vm603 = vcmp.eq.f32.partialorder %v561, inf
    %v604 = vsel %vm603, %v561, %v602
    %vm605 = vcmp.eq.f32.partialorder %v561, 0.0
    %v606 = vand.u32 %v561, 2147483648
    %v607 = vsel %vm605, %v606, %v604
    %v608 = vrsqrt.pop %v562
    %v609 = vmul.f32 %v562, %v608
    %vm610 = vcmp.eq.f32.partialorder %v562, inf
    %v611 = vsel %vm610, %v562, %v609
    %vm612 = vcmp.eq.f32.partialorder %v562, 0.0
    %v613 = vand.u32 %v562, 2147483648
    %v614 = vsel %vm612, %v613, %v611
    %v615 = vrsqrt.pop %v563
    %v616 = vmul.f32 %v563, %v615
    %vm617 = vcmp.eq.f32.partialorder %v563, inf
    %v618 = vsel %vm617, %v563, %v616
    %vm619 = vcmp.eq.f32.partialorder %v563, 0.0
    %v620 = vand.u32 %v563, 2147483648
    %v621 = vsel %vm619, %v620, %v618
    %v622 = vrsqrt.pop %v564
    %v623 = vmul.f32 %v564, %v622
    %vm624 = vcmp.eq.f32.partialorder %v564, inf
    %v625 = vsel %vm624, %v564, %v623
    %vm626 = vcmp.eq.f32.partialorder %v564, 0.0
    %v627 = vand.u32 %v564, 2147483648
    %v628 = vsel %vm626, %v627, %v625
    %v629 = vrsqrt.pop %v565
    %v630 = vmul.f32 %v565, %v629
    %vm631 = vcmp.eq.f32.partialorder %v565, inf
    %v632 = vsel %vm631, %v565, %v630
    %vm633 = vcmp.eq.f32.partialorder %v565, 0.0
    %v634 = vand.u32 %v565, 2147483648
    %v635 = vsel %vm633, %v634, %v632
    %v636 = vrsqrt.pop %v566
    %v637 = vmul.f32 %v566, %v636
    %vm638 = vcmp.eq.f32.partialorder %v566, inf
    %v639 = vsel %vm638, %v566, %v637
    %vm640 = vcmp.eq.f32.partialorder %v566, 0.0
    %v641 = vand.u32 %v566, 2147483648
    %v642 = vsel %vm640, %v641, %v639
    %v643 = vrsqrt.pop %v567
    %v644 = vmul.f32 %v567, %v643
    %vm645 = vcmp.eq.f32.partialorder %v567, inf
    %v646 = vsel %vm645, %v567, %v644
    %vm647 = vcmp.eq.f32.partialorder %v567, 0.0
    %v648 = vand.u32 %v567, 2147483648
    %v649 = vsel %vm647, %v648, %v646
    %v650 = vrsqrt.pop %v568
    %v651 = vmul.f32 %v568, %v650
    %vm652 = vcmp.eq.f32.partialorder %v568, inf
    %v653 = vsel %vm652, %v568, %v651
    %vm654 = vcmp.eq.f32.partialorder %v568, 0.0
    %v655 = vand.u32 %v568, 2147483648
    %v656 = vsel %vm654, %v655, %v653
    %v657 = vrsqrt.pop %v569
    %v658 = vmul.f32 %v569, %v657
    %vm659 = vcmp.eq.f32.partialorder %v569, inf
    %v660 = vsel %vm659, %v569, %v658
    %vm661 = vcmp.eq.f32.partialorder %v569, 0.0
    %v662 = vand.u32 %v569, 2147483648
    %v663 = vsel %vm661, %v662, %v660
    %v664 = vrsqrt.pop %v570
    %v665 = vmul.f32 %v570, %v664
    %vm666 = vcmp.eq.f32.partialorder %v570, inf
    %v667 = vsel %vm666, %v570, %v665
    %vm668 = vcmp.eq.f32.partialorder %v570, 0.0
    %v669 = vand.u32 %v570, 2147483648
    %v670 = vsel %vm668, %v669, %v667
    %v671 = vrsqrt.pop %v571
    %v672 = vmul.f32 %v571, %v671
    %vm673 = vcmp.eq.f32.partialorder %v571, inf
    %v674 = vsel %vm673, %v571, %v672
    %vm675 = vcmp.eq.f32.partialorder %v571, 0.0
    %v676 = vand.u32 %v571, 2147483648
    %v677 = vsel %vm675, %v676, %v674
    %v678 = vrsqrt.pop %v572
    %v679 = vmul.f32 %v572, %v678
    %vm680 = vcmp.eq.f32.partialorder %v572, inf
    %v681 = vsel %vm680, %v572, %v679
    %vm682 = vcmp.eq.f32.partialorder %v572, 0.0
    %v683 = vand.u32 %v572, 2147483648
    %v684 = vsel %vm682, %v683, %v681
    %v685 = vsub.f32 %v451, %v579
    %v686 = vsub.f32 %v458, %v586
    %v687 = vsub.f32 %v465, %v593
    %v688 = vsub.f32 %v472, %v600
    %v689 = vsub.f32 %v479, %v607
    %v690 = vsub.f32 %v486, %v614
    %v691 = vsub.f32 %v493, %v621
    %v692 = vsub.f32 %v500, %v628
    %v693 = vsub.f32 %v507, %v635
    %v694 = vsub.f32 %v514, %v642
    %v695 = vsub.f32 %v521, %v649
    %v696 = vsub.f32 %v528, %v656
    %v697 = vsub.f32 %v535, %v663
    %v698 = vsub.f32 %v542, %v670
    %v699 = vsub.f32 %v549, %v677
    %v700 = vsub.f32 %v556, %v684
    %v701 = vmul.f32 %v685, %v685
    %v702 = vmul.f32 %v686, %v686
    %v703 = vmul.f32 %v687, %v687
    %v704 = vmul.f32 %v688, %v688
    %v705 = vmul.f32 %v689, %v689
    %v706 = vmul.f32 %v690, %v690
    %v707 = vmul.f32 %v691, %v691
    %v708 = vmul.f32 %v692, %v692
    %v709 = vmul.f32 %v693, %v693
    %v710 = vmul.f32 %v694, %v694
    %v711 = vmul.f32 %v695, %v695
    %v712 = vmul.f32 %v696, %v696
    %v713 = vmul.f32 %v697, %v697
    %v714 = vmul.f32 %v698, %v698
    %v715 = vmul.f32 %v699, %v699
    %v716 = vmul.f32 %v700, %v700
    %v717 = vsel %vm356, %v701, 0.0
    %v718 = vsel %vm357, %v702, 0.0
    %v719 = vsel %vm358, %v703, 0.0
    %v720 = vsel %vm359, %v704, 0.0
    %v721 = vsel %vm360, %v705, 0.0
    %v722 = vsel %vm361, %v706, 0.0
    %v723 = vsel %vm362, %v707, 0.0
    %v724 = vsel %vm363, %v708, 0.0
    %v725 = vsel %vm364, %v709, 0.0
    %v726 = vsel %vm365, %v710, 0.0
    %v727 = vsel %vm366, %v711, 0.0
    %v728 = vsel %vm367, %v712, 0.0
    %v729 = vsel %vm368, %v713, 0.0
    %v730 = vsel %vm369, %v714, 0.0
    %v731 = vsel %vm370, %v715, 0.0
    %v732 = vsel %vm371, %v716, 0.0
    %749 = vrot.lane.b32.xlu0 %v717, 126
    %v750 = vpop.permute.xlu0 %749
    %751 = vrot.lane.b32.xlu0 %v718, 126
    %v752 = vpop.permute.xlu0 %751
    %753 = vrot.lane.b32.xlu0 %v719, 126
    %v754 = vpop.permute.xlu0 %753
    %755 = vrot.lane.b32.xlu0 %v720, 126
    %v756 = vpop.permute.xlu0 %755
    %757 = vrot.lane.b32.xlu0 %v721, 126
    %v758 = vpop.permute.xlu0 %757
    %759 = vrot.lane.b32.xlu0 %v722, 126
    %v760 = vpop.permute.xlu0 %759
    %761 = vrot.lane.b32.xlu0 %v723, 126
    %v762 = vpop.permute.xlu0 %761
    %763 = vrot.lane.b32.xlu0 %v724, 126
    %v764 = vpop.permute.xlu0 %763
    %765 = vrot.lane.b32.xlu0 %v725, 126
    %v766 = vpop.permute.xlu0 %765
    %767 = vrot.lane.b32.xlu0 %v726, 126
    %v768 = vpop.permute.xlu0 %767
    %769 = vrot.lane.b32.xlu0 %v727, 126
    %v770 = vpop.permute.xlu0 %769
    %771 = vrot.lane.b32.xlu0 %v728, 126
    %v772 = vpop.permute.xlu0 %771
    %773 = vrot.lane.b32.xlu0 %v729, 126
    %v774 = vpop.permute.xlu0 %773
    %775 = vrot.lane.b32.xlu0 %v730, 126
    %v776 = vpop.permute.xlu0 %775
    %777 = vrot.lane.b32.xlu0 %v731, 126
    %v778 = vpop.permute.xlu0 %777
    %779 = vrot.lane.b32.xlu0 %v732, 126
    %v780 = vpop.permute.xlu0 %779
    %v797 = vsel %vm388, %v750, 0.0
    %v798 = vsel %vm388, %v752, 0.0
    %v799 = vadd.f32 %v797, %v798
    %v800 = vsel %vm388, %v754, 0.0
    %v801 = vadd.f32 %v799, %v800
    %v802 = vsel %vm388, %v756, 0.0
    %v803 = vadd.f32 %v801, %v802
    %v804 = vsel %vm388, %v758, 0.0
    %v805 = vadd.f32 %v803, %v804
    %v806 = vsel %vm388, %v760, 0.0
    %v807 = vadd.f32 %v805, %v806
    %v808 = vsel %vm388, %v762, 0.0
    %v809 = vadd.f32 %v807, %v808
    %v810 = vsel %vm388, %v764, 0.0
    %v811 = vadd.f32 %v809, %v810
    %v812 = vsel %vm388, %v766, 0.0
    %v813 = vadd.f32 %v811, %v812
    %v814 = vsel %vm388, %v768, 0.0
    %v815 = vadd.f32 %v813, %v814
    %v816 = vsel %vm388, %v770, 0.0
    %v817 = vadd.f32 %v815, %v816
    %v818 = vsel %vm388, %v772, 0.0
    %v819 = vadd.f32 %v817, %v818
    %v820 = vsel %vm388, %v774, 0.0
    %v821 = vadd.f32 %v819, %v820
    %v822 = vsel %vm388, %v776, 0.0
    %v823 = vadd.f32 %v821, %v822
    %v824 = vsel %vm388, %v778, 0.0
    %v825 = vadd.f32 %v823, %v824
    %v826 = vsel %vm388, %v780, 0.0
    %v827 = vadd.f32 %v825, %v826
    %828 = vadd.xlane.f32.xlu0 %v827
    %v829 = vpop.xlane.xlu0 %828
    %v830 = vrot.slane %v829, 4
    %v831 = vadd.f32 %v829, %v830
    %v832 = vrot.slane %v831, 2
    %v833 = vadd.f32 %v831, %v832
    %v834 = vrot.slane %v833, 1
    %v835 = vadd.f32 %v833, %v834
    %s836 = vtos %v835
    %v837 = vsub.f32 %v17, %v33
    %v838 = vsub.f32 %v18, %v34
    %v839 = vsub.f32 %v19, %v35
    %v840 = vsub.f32 %v20, %v36
    %v841 = vsub.f32 %v21, %v37
    %v842 = vsub.f32 %v22, %v38
    %v843 = vsub.f32 %v23, %v39
    %v844 = vsub.f32 %v24, %v40
    %v845 = vsub.f32 %v25, %v41
    %v846 = vsub.f32 %v26, %v42
    %v847 = vsub.f32 %v27, %v43
    %v848 = vsub.f32 %v28, %v44
    %v849 = vsub.f32 %v29, %v45
    %v850 = vsub.f32 %v30, %v46
    %v851 = vsub.f32 %v31, %v47
    %v852 = vsub.f32 %v32, %v48
    %v853 = vmul.f32 %v837, %v837
    %v854 = vmul.f32 %v838, %v838
    %v855 = vmul.f32 %v839, %v839
    %v856 = vmul.f32 %v840, %v840
    %v857 = vmul.f32 %v841, %v841
    %v858 = vmul.f32 %v842, %v842
    %v859 = vmul.f32 %v843, %v843
    %v860 = vmul.f32 %v844, %v844
    %v861 = vmul.f32 %v845, %v845
    %v862 = vmul.f32 %v846, %v846
    %v863 = vmul.f32 %v847, %v847
    %v864 = vmul.f32 %v848, %v848
    %v865 = vmul.f32 %v849, %v849
    %v866 = vmul.f32 %v850, %v850
    %v867 = vmul.f32 %v851, %v851
    %v868 = vmul.f32 %v852, %v852
    %v869 = vsel %vm116, %v853, 0.0
    %v870 = vsel %vm117, %v854, 0.0
    %v871 = vsel %vm118, %v855, 0.0
    %v872 = vsel %vm119, %v856, 0.0
    %v873 = vsel %vm120, %v857, 0.0
    %v874 = vsel %vm121, %v858, 0.0
    %v875 = vsel %vm122, %v859, 0.0
    %v876 = vsel %vm123, %v860, 0.0
    %v877 = vsel %vm124, %v861, 0.0
    %v878 = vsel %vm125, %v862, 0.0
    %v879 = vsel %vm126, %v863, 0.0
    %v880 = vsel %vm127, %v864, 0.0
    %v881 = vsel %vm128, %v865, 0.0
    %v882 = vsel %vm129, %v866, 0.0
    %v883 = vsel %vm130, %v867, 0.0
    %v884 = vsel %vm131, %v868, 0.0
    %901 = vrot.lane.b32.xlu0 %v869, 124
    %v902 = vpop.permute.xlu0 %901
    %903 = vrot.lane.b32.xlu0 %v870, 124
    %v904 = vpop.permute.xlu0 %903
    %905 = vrot.lane.b32.xlu0 %v871, 124
    %v906 = vpop.permute.xlu0 %905
    %907 = vrot.lane.b32.xlu0 %v872, 124
    %v908 = vpop.permute.xlu0 %907
    %909 = vrot.lane.b32.xlu0 %v873, 124
    %v910 = vpop.permute.xlu0 %909
    %911 = vrot.lane.b32.xlu0 %v874, 124
    %v912 = vpop.permute.xlu0 %911
    %913 = vrot.lane.b32.xlu0 %v875, 124
    %v914 = vpop.permute.xlu0 %913
    %915 = vrot.lane.b32.xlu0 %v876, 124
    %v916 = vpop.permute.xlu0 %915
    %917 = vrot.lane.b32.xlu0 %v877, 124
    %v918 = vpop.permute.xlu0 %917
    %919 = vrot.lane.b32.xlu0 %v878, 124
    %v920 = vpop.permute.xlu0 %919
    %921 = vrot.lane.b32.xlu0 %v879, 124
    %v922 = vpop.permute.xlu0 %921
    %923 = vrot.lane.b32.xlu0 %v880, 124
    %v924 = vpop.permute.xlu0 %923
    %925 = vrot.lane.b32.xlu0 %v881, 124
    %v926 = vpop.permute.xlu0 %925
    %927 = vrot.lane.b32.xlu0 %v882, 124
    %v928 = vpop.permute.xlu0 %927
    %929 = vrot.lane.b32.xlu0 %v883, 124
    %v930 = vpop.permute.xlu0 %929
    %931 = vrot.lane.b32.xlu0 %v884, 124
    %v932 = vpop.permute.xlu0 %931
    %vm949 = vcmask 7168
    %v950 = vsel %vm949, %v902, 0.0
    %v951 = vsel %vm949, %v904, 0.0
    %v952 = vadd.f32 %v950, %v951
    %v953 = vsel %vm949, %v906, 0.0
    %v954 = vadd.f32 %v952, %v953
    %v955 = vsel %vm949, %v908, 0.0
    %v956 = vadd.f32 %v954, %v955
    %v957 = vsel %vm949, %v910, 0.0
    %v958 = vadd.f32 %v956, %v957
    %v959 = vsel %vm949, %v912, 0.0
    %v960 = vadd.f32 %v958, %v959
    %v961 = vsel %vm949, %v914, 0.0
    %v962 = vadd.f32 %v960, %v961
    %v963 = vsel %vm949, %v916, 0.0
    %v964 = vadd.f32 %v962, %v963
    %v965 = vsel %vm949, %v918, 0.0
    %v966 = vadd.f32 %v964, %v965
    %v967 = vsel %vm949, %v920, 0.0
    %v968 = vadd.f32 %v966, %v967
    %v969 = vsel %vm949, %v922, 0.0
    %v970 = vadd.f32 %v968, %v969
    %v971 = vsel %vm949, %v924, 0.0
    %v972 = vadd.f32 %v970, %v971
    %v973 = vsel %vm949, %v926, 0.0
    %v974 = vadd.f32 %v972, %v973
    %v975 = vsel %vm949, %v928, 0.0
    %v976 = vadd.f32 %v974, %v975
    %v977 = vsel %vm949, %v930, 0.0
    %v978 = vadd.f32 %v976, %v977
    %v979 = vsel %vm949, %v932, 0.0
    %v980 = vadd.f32 %v978, %v979
    %981 = vadd.xlane.f32.xlu0 %v980
    %v982 = vpop.xlane.xlu0 %981
    %v983 = vrot.slane %v982, 4
    %v984 = vadd.f32 %v982, %v983
    %v985 = vrot.slane %v984, 2
    %v986 = vadd.f32 %v984, %v985
    %v987 = vrot.slane %v986, 1
    %v988 = vadd.f32 %v986, %v987
    %s989 = vtos %v988
    %v990 = vsel %vm148, %v853, 0.0
    %v991 = vsel %vm149, %v854, 0.0
    %v992 = vsel %vm150, %v855, 0.0
    %v993 = vsel %vm151, %v856, 0.0
    %v994 = vsel %vm152, %v857, 0.0
    %v995 = vsel %vm153, %v858, 0.0
    %v996 = vsel %vm154, %v859, 0.0
    %v997 = vsel %vm155, %v860, 0.0
    %v998 = vsel %vm156, %v861, 0.0
    %v999 = vsel %vm157, %v862, 0.0
    %v1000 = vsel %vm158, %v863, 0.0
    %v1001 = vsel %vm159, %v864, 0.0
    %v1002 = vsel %vm160, %v865, 0.0
    %v1003 = vsel %vm161, %v866, 0.0
    %v1004 = vsel %vm162, %v867, 0.0
    %v1005 = vsel %vm163, %v868, 0.0
    %1022 = vrot.lane.b32.xlu0 %v990, 124
    %v1023 = vpop.permute.xlu0 %1022
    %1024 = vrot.lane.b32.xlu0 %v991, 124
    %v1025 = vpop.permute.xlu0 %1024
    %1026 = vrot.lane.b32.xlu0 %v992, 124
    %v1027 = vpop.permute.xlu0 %1026
    %1028 = vrot.lane.b32.xlu0 %v993, 124
    %v1029 = vpop.permute.xlu0 %1028
    %1030 = vrot.lane.b32.xlu0 %v994, 124
    %v1031 = vpop.permute.xlu0 %1030
    %1032 = vrot.lane.b32.xlu0 %v995, 124
    %v1033 = vpop.permute.xlu0 %1032
    %1034 = vrot.lane.b32.xlu0 %v996, 124
    %v1035 = vpop.permute.xlu0 %1034
    %1036 = vrot.lane.b32.xlu0 %v997, 124
    %v1037 = vpop.permute.xlu0 %1036
    %1038 = vrot.lane.b32.xlu0 %v998, 124
    %v1039 = vpop.permute.xlu0 %1038
    %1040 = vrot.lane.b32.xlu0 %v999, 124
    %v1041 = vpop.permute.xlu0 %1040
    %1042 = vrot.lane.b32.xlu0 %v1000, 124
    %v1043 = vpop.permute.xlu0 %1042
    %1044 = vrot.lane.b32.xlu0 %v1001, 124
    %v1045 = vpop.permute.xlu0 %1044
    %1046 = vrot.lane.b32.xlu0 %v1002, 124
    %v1047 = vpop.permute.xlu0 %1046
    %1048 = vrot.lane.b32.xlu0 %v1003, 124
    %v1049 = vpop.permute.xlu0 %1048
    %1050 = vrot.lane.b32.xlu0 %v1004, 124
    %v1051 = vpop.permute.xlu0 %1050
    %1052 = vrot.lane.b32.xlu0 %v1005, 124
    %v1053 = vpop.permute.xlu0 %1052
    %v1070 = vsel %vm949, %v1023, 0.0
    %v1071 = vsel %vm949, %v1025, 0.0
    %v1072 = vadd.f32 %v1070, %v1071
    %v1073 = vsel %vm949, %v1027, 0.0
    %v1074 = vadd.f32 %v1072, %v1073
    %v1075 = vsel %vm949, %v1029, 0.0
    %v1076 = vadd.f32 %v1074, %v1075
    %v1077 = vsel %vm949, %v1031, 0.0
    %v1078 = vadd.f32 %v1076, %v1077
    %v1079 = vsel %vm949, %v1033, 0.0
    %v1080 = vadd.f32 %v1078, %v1079
    %v1081 = vsel %vm949, %v1035, 0.0
    %v1082 = vadd.f32 %v1080, %v1081
    %v1083 = vsel %vm949, %v1037, 0.0
    %v1084 = vadd.f32 %v1082, %v1083
    %v1085 = vsel %vm949, %v1039, 0.0
    %v1086 = vadd.f32 %v1084, %v1085
    %v1087 = vsel %vm949, %v1041, 0.0
    %v1088 = vadd.f32 %v1086, %v1087
    %v1089 = vsel %vm949, %v1043, 0.0
    %v1090 = vadd.f32 %v1088, %v1089
    %v1091 = vsel %vm949, %v1045, 0.0
    %v1092 = vadd.f32 %v1090, %v1091
    %v1093 = vsel %vm949, %v1047, 0.0
    %v1094 = vadd.f32 %v1092, %v1093
    %v1095 = vsel %vm949, %v1049, 0.0
    %v1096 = vadd.f32 %v1094, %v1095
    %v1097 = vsel %vm949, %v1051, 0.0
    %v1098 = vadd.f32 %v1096, %v1097
    %v1099 = vsel %vm949, %v1053, 0.0
    %v1100 = vadd.f32 %v1098, %v1099
    %1101 = vadd.xlane.f32.xlu0 %v1100
    %v1102 = vpop.xlane.xlu0 %1101
    %v1103 = vrot.slane %v1102, 4
    %v1104 = vadd.f32 %v1102, %v1103
    %v1105 = vrot.slane %v1104, 2
    %v1106 = vadd.f32 %v1104, %v1105
    %v1107 = vrot.slane %v1106, 1
    %v1108 = vadd.f32 %v1106, %v1107
    %s1109 = vtos %v1108
    %v1110 = vmax.f32 %v17, 0.0
    %v1111 = vmax.f32 %v18, 0.0
    %v1112 = vmax.f32 %v19, 0.0
    %v1113 = vmax.f32 %v20, 0.0
    %v1114 = vmax.f32 %v21, 0.0
    %v1115 = vmax.f32 %v22, 0.0
    %v1116 = vmax.f32 %v23, 0.0
    %v1117 = vmax.f32 %v24, 0.0
    %v1118 = vmax.f32 %v25, 0.0
    %v1119 = vmax.f32 %v26, 0.0
    %v1120 = vmax.f32 %v27, 0.0
    %v1121 = vmax.f32 %v28, 0.0
    %v1122 = vmax.f32 %v29, 0.0
    %v1123 = vmax.f32 %v30, 0.0
    %v1124 = vmax.f32 %v31, 0.0
    %v1125 = vmax.f32 %v32, 0.0
    %v1126 = vmul.f32 %v17, %v33
    %v1127 = vmul.f32 %v18, %v34
    %v1128 = vmul.f32 %v19, %v35
    %v1129 = vmul.f32 %v20, %v36
    %v1130 = vmul.f32 %v21, %v37
    %v1131 = vmul.f32 %v22, %v38
    %v1132 = vmul.f32 %v23, %v39
    %v1133 = vmul.f32 %v24, %v40
    %v1134 = vmul.f32 %v25, %v41
    %v1135 = vmul.f32 %v26, %v42
    %v1136 = vmul.f32 %v27, %v43
    %v1137 = vmul.f32 %v28, %v44
    %v1138 = vmul.f32 %v29, %v45
    %v1139 = vmul.f32 %v30, %v46
    %v1140 = vmul.f32 %v31, %v47
    %v1141 = vmul.f32 %v32, %v48
    %v1142 = vsub.f32 %v1110, %v1126
    %v1143 = vsub.f32 %v1111, %v1127
    %v1144 = vsub.f32 %v1112, %v1128
    %v1145 = vsub.f32 %v1113, %v1129
    %v1146 = vsub.f32 %v1114, %v1130
    %v1147 = vsub.f32 %v1115, %v1131
    %v1148 = vsub.f32 %v1116, %v1132
    %v1149 = vsub.f32 %v1117, %v1133
    %v1150 = vsub.f32 %v1118, %v1134
    %v1151 = vsub.f32 %v1119, %v1135
    %v1152 = vsub.f32 %v1120, %v1136
    %v1153 = vsub.f32 %v1121, %v1137
    %v1154 = vsub.f32 %v1122, %v1138
    %v1155 = vsub.f32 %v1123, %v1139
    %v1156 = vsub.f32 %v1124, %v1140
    %v1157 = vsub.f32 %v1125, %v1141
    %v1158 = vand.u32 2147483647, %v17
    %v1159 = vand.u32 2147483647, %v18
    %v1160 = vand.u32 2147483647, %v19
    %v1161 = vand.u32 2147483647, %v20
    %v1162 = vand.u32 2147483647, %v21
    %v1163 = vand.u32 2147483647, %v22
    %v1164 = vand.u32 2147483647, %v23
    %v1165 = vand.u32 2147483647, %v24
    %v1166 = vand.u32 2147483647, %v25
    %v1167 = vand.u32 2147483647, %v26
    %v1168 = vand.u32 2147483647, %v27
    %v1169 = vand.u32 2147483647, %v28
    %v1170 = vand.u32 2147483647, %v29
    %v1171 = vand.u32 2147483647, %v30
    %v1172 = vand.u32 2147483647, %v31
    %v1173 = vand.u32 2147483647, %v32
    %v1174 = vsub.f32 0.0, %v1158
    %v1175 = vsub.f32 0.0, %v1159
    %v1176 = vsub.f32 0.0, %v1160
    %v1177 = vsub.f32 0.0, %v1161
    %v1178 = vsub.f32 0.0, %v1162
    %v1179 = vsub.f32 0.0, %v1163
    %v1180 = vsub.f32 0.0, %v1164
    %v1181 = vsub.f32 0.0, %v1165
    %v1182 = vsub.f32 0.0, %v1166
    %v1183 = vsub.f32 0.0, %v1167
    %v1184 = vsub.f32 0.0, %v1168
    %v1185 = vsub.f32 0.0, %v1169
    %v1186 = vsub.f32 0.0, %v1170
    %v1187 = vsub.f32 0.0, %v1171
    %v1188 = vsub.f32 0.0, %v1172
    %v1189 = vsub.f32 0.0, %v1173
    %v1190 = vmul.f32 %v1174, 1.442695
    %v1191 = vpow.pop %v1190
    %v1192 = vmul.f32 %v1175, 1.442695
    %v1193 = vpow.pop %v1192
    %v1194 = vmul.f32 %v1176, 1.442695
    %v1195 = vpow.pop %v1194
    %v1196 = vmul.f32 %v1177, 1.442695
    %v1197 = vpow.pop %v1196
    %v1198 = vmul.f32 %v1178, 1.442695
    %v1199 = vpow.pop %v1198
    %v1200 = vmul.f32 %v1179, 1.442695
    %v1201 = vpow.pop %v1200
    %v1202 = vmul.f32 %v1180, 1.442695
    %v1203 = vpow.pop %v1202
    %v1204 = vmul.f32 %v1181, 1.442695
    %v1205 = vpow.pop %v1204
    %v1206 = vmul.f32 %v1182, 1.442695
    %v1207 = vpow.pop %v1206
    %v1208 = vmul.f32 %v1183, 1.442695
    %v1209 = vpow.pop %v1208
    %v1210 = vmul.f32 %v1184, 1.442695
    %v1211 = vpow.pop %v1210
    %v1212 = vmul.f32 %v1185, 1.442695
    %v1213 = vpow.pop %v1212
    %v1214 = vmul.f32 %v1186, 1.442695
    %v1215 = vpow.pop %v1214
    %v1216 = vmul.f32 %v1187, 1.442695
    %v1217 = vpow.pop %v1216
    %v1218 = vmul.f32 %v1188, 1.442695
    %v1219 = vpow.pop %v1218
    %v1220 = vmul.f32 %v1189, 1.442695
    %v1221 = vpow.pop %v1220
    %v1222 = vadd.f32 %v1191, 1.0
    %v1223 = vlog2.pop %v1222
    %v1224 = vmul.f32 %v1223, 0.6931472
    %v1225 = vmul.f32 -0.5, %v1191
    %v1226 = vadd.f32 %v1225, 1.0
    %v1227 = vmul.f32 %v1226, %v1191
    %v1228 = vand.u32 2147483647, %v1191
    %vm1229 = vcmp.lt.f32.partialorder %v1228, 0.0004427343
    %v1230 = vsel %vm1229, %v1227, %v1224
    %v1231 = vadd.f32 %v1193, 1.0
    %v1232 = vlog2.pop %v1231
    %v1233 = vmul.f32 %v1232, 0.6931472
    %v1234 = vmul.f32 -0.5, %v1193
    %v1235 = vadd.f32 %v1234, 1.0
    %v1236 = vmul.f32 %v1235, %v1193
    %v1237 = vand.u32 2147483647, %v1193
    %vm1238 = vcmp.lt.f32.partialorder %v1237, 0.0004427343
    %v1239 = vsel %vm1238, %v1236, %v1233
    %v1240 = vadd.f32 %v1195, 1.0
    %v1241 = vlog2.pop %v1240
    %v1242 = vmul.f32 %v1241, 0.6931472
    %v1243 = vmul.f32 -0.5, %v1195
    %v1244 = vadd.f32 %v1243, 1.0
    %v1245 = vmul.f32 %v1244, %v1195
    %v1246 = vand.u32 2147483647, %v1195
    %vm1247 = vcmp.lt.f32.partialorder %v1246, 0.0004427343
    %v1248 = vsel %vm1247, %v1245, %v1242
    %v1249 = vadd.f32 %v1197, 1.0
    %v1250 = vlog2.pop %v1249
    %v1251 = vmul.f32 %v1250, 0.6931472
    %v1252 = vmul.f32 -0.5, %v1197
    %v1253 = vadd.f32 %v1252, 1.0
    %v1254 = vmul.f32 %v1253, %v1197
    %v1255 = vand.u32 2147483647, %v1197
    %vm1256 = vcmp.lt.f32.partialorder %v1255, 0.0004427343
    %v1257 = vsel %vm1256, %v1254, %v1251
    %v1258 = vadd.f32 %v1199, 1.0
    %v1259 = vlog2.pop %v1258
    %v1260 = vmul.f32 %v1259, 0.6931472
    %v1261 = vmul.f32 -0.5, %v1199
    %v1262 = vadd.f32 %v1261, 1.0
    %v1263 = vmul.f32 %v1262, %v1199
    %v1264 = vand.u32 2147483647, %v1199
    %vm1265 = vcmp.lt.f32.partialorder %v1264, 0.0004427343
    %v1266 = vsel %vm1265, %v1263, %v1260
    %v1267 = vadd.f32 %v1201, 1.0
    %v1268 = vlog2.pop %v1267
    %v1269 = vmul.f32 %v1268, 0.6931472
    %v1270 = vmul.f32 -0.5, %v1201
    %v1271 = vadd.f32 %v1270, 1.0
    %v1272 = vmul.f32 %v1271, %v1201
    %v1273 = vand.u32 2147483647, %v1201
    %vm1274 = vcmp.lt.f32.partialorder %v1273, 0.0004427343
    %v1275 = vsel %vm1274, %v1272, %v1269
    %v1276 = vadd.f32 %v1203, 1.0
    %v1277 = vlog2.pop %v1276
    %v1278 = vmul.f32 %v1277, 0.6931472
    %v1279 = vmul.f32 -0.5, %v1203
    %v1280 = vadd.f32 %v1279, 1.0
    %v1281 = vmul.f32 %v1280, %v1203
    %v1282 = vand.u32 2147483647, %v1203
    %vm1283 = vcmp.lt.f32.partialorder %v1282, 0.0004427343
    %v1284 = vsel %vm1283, %v1281, %v1278
    %v1285 = vadd.f32 %v1205, 1.0
    %v1286 = vlog2.pop %v1285
    %v1287 = vmul.f32 %v1286, 0.6931472
    %v1288 = vmul.f32 -0.5, %v1205
    %v1289 = vadd.f32 %v1288, 1.0
    %v1290 = vmul.f32 %v1289, %v1205
    %v1291 = vand.u32 2147483647, %v1205
    %vm1292 = vcmp.lt.f32.partialorder %v1291, 0.0004427343
    %v1293 = vsel %vm1292, %v1290, %v1287
    %v1294 = vadd.f32 %v1207, 1.0
    %v1295 = vlog2.pop %v1294
    %v1296 = vmul.f32 %v1295, 0.6931472
    %v1297 = vmul.f32 -0.5, %v1207
    %v1298 = vadd.f32 %v1297, 1.0
    %v1299 = vmul.f32 %v1298, %v1207
    %v1300 = vand.u32 2147483647, %v1207
    %vm1301 = vcmp.lt.f32.partialorder %v1300, 0.0004427343
    %v1302 = vsel %vm1301, %v1299, %v1296
    %v1303 = vadd.f32 %v1209, 1.0
    %v1304 = vlog2.pop %v1303
    %v1305 = vmul.f32 %v1304, 0.6931472
    %v1306 = vmul.f32 -0.5, %v1209
    %v1307 = vadd.f32 %v1306, 1.0
    %v1308 = vmul.f32 %v1307, %v1209
    %v1309 = vand.u32 2147483647, %v1209
    %vm1310 = vcmp.lt.f32.partialorder %v1309, 0.0004427343
    %v1311 = vsel %vm1310, %v1308, %v1305
    %v1312 = vadd.f32 %v1211, 1.0
    %v1313 = vlog2.pop %v1312
    %v1314 = vmul.f32 %v1313, 0.6931472
    %v1315 = vmul.f32 -0.5, %v1211
    %v1316 = vadd.f32 %v1315, 1.0
    %v1317 = vmul.f32 %v1316, %v1211
    %v1318 = vand.u32 2147483647, %v1211
    %vm1319 = vcmp.lt.f32.partialorder %v1318, 0.0004427343
    %v1320 = vsel %vm1319, %v1317, %v1314
    %v1321 = vadd.f32 %v1213, 1.0
    %v1322 = vlog2.pop %v1321
    %v1323 = vmul.f32 %v1322, 0.6931472
    %v1324 = vmul.f32 -0.5, %v1213
    %v1325 = vadd.f32 %v1324, 1.0
    %v1326 = vmul.f32 %v1325, %v1213
    %v1327 = vand.u32 2147483647, %v1213
    %vm1328 = vcmp.lt.f32.partialorder %v1327, 0.0004427343
    %v1329 = vsel %vm1328, %v1326, %v1323
    %v1330 = vadd.f32 %v1215, 1.0
    %v1331 = vlog2.pop %v1330
    %v1332 = vmul.f32 %v1331, 0.6931472
    %v1333 = vmul.f32 -0.5, %v1215
    %v1334 = vadd.f32 %v1333, 1.0
    %v1335 = vmul.f32 %v1334, %v1215
    %v1336 = vand.u32 2147483647, %v1215
    %vm1337 = vcmp.lt.f32.partialorder %v1336, 0.0004427343
    %v1338 = vsel %vm1337, %v1335, %v1332
    %v1339 = vadd.f32 %v1217, 1.0
    %v1340 = vlog2.pop %v1339
    %v1341 = vmul.f32 %v1340, 0.6931472
    %v1342 = vmul.f32 -0.5, %v1217
    %v1343 = vadd.f32 %v1342, 1.0
    %v1344 = vmul.f32 %v1343, %v1217
    %v1345 = vand.u32 2147483647, %v1217
    %vm1346 = vcmp.lt.f32.partialorder %v1345, 0.0004427343
    %v1347 = vsel %vm1346, %v1344, %v1341
    %v1348 = vadd.f32 %v1219, 1.0
    %v1349 = vlog2.pop %v1348
    %v1350 = vmul.f32 %v1349, 0.6931472
    %v1351 = vmul.f32 -0.5, %v1219
    %v1352 = vadd.f32 %v1351, 1.0
    %v1353 = vmul.f32 %v1352, %v1219
    %v1354 = vand.u32 2147483647, %v1219
    %vm1355 = vcmp.lt.f32.partialorder %v1354, 0.0004427343
    %v1356 = vsel %vm1355, %v1353, %v1350
    %v1357 = vadd.f32 %v1221, 1.0
    %v1358 = vlog2.pop %v1357
    %v1359 = vmul.f32 %v1358, 0.6931472
    %v1360 = vmul.f32 -0.5, %v1221
    %v1361 = vadd.f32 %v1360, 1.0
    %v1362 = vmul.f32 %v1361, %v1221
    %v1363 = vand.u32 2147483647, %v1221
    %vm1364 = vcmp.lt.f32.partialorder %v1363, 0.0004427343
    %v1365 = vsel %vm1364, %v1362, %v1359
    %v1366 = vadd.f32 %v1142, %v1230
    %v1367 = vadd.f32 %v1143, %v1239
    %v1368 = vadd.f32 %v1144, %v1248
    %v1369 = vadd.f32 %v1145, %v1257
    %v1370 = vadd.f32 %v1146, %v1266
    %v1371 = vadd.f32 %v1147, %v1275
    %v1372 = vadd.f32 %v1148, %v1284
    %v1373 = vadd.f32 %v1149, %v1293
    %v1374 = vadd.f32 %v1150, %v1302
    %v1375 = vadd.f32 %v1151, %v1311
    %v1376 = vadd.f32 %v1152, %v1320
    %v1377 = vadd.f32 %v1153, %v1329
    %v1378 = vadd.f32 %v1154, %v1338
    %v1379 = vadd.f32 %v1155, %v1347
    %v1380 = vadd.f32 %v1156, %v1356
    %v1381 = vadd.f32 %v1157, %v1365
    %v1382 = vsel %vm356, %v1366, 0.0
    %v1383 = vsel %vm357, %v1367, 0.0
    %v1384 = vsel %vm358, %v1368, 0.0
    %v1385 = vsel %vm359, %v1369, 0.0
    %v1386 = vsel %vm360, %v1370, 0.0
    %v1387 = vsel %vm361, %v1371, 0.0
    %v1388 = vsel %vm362, %v1372, 0.0
    %v1389 = vsel %vm363, %v1373, 0.0
    %v1390 = vsel %vm364, %v1374, 0.0
    %v1391 = vsel %vm365, %v1375, 0.0
    %v1392 = vsel %vm366, %v1376, 0.0
    %v1393 = vsel %vm367, %v1377, 0.0
    %v1394 = vsel %vm368, %v1378, 0.0
    %v1395 = vsel %vm369, %v1379, 0.0
    %v1396 = vsel %vm370, %v1380, 0.0
    %v1397 = vsel %vm371, %v1381, 0.0
    %1414 = vrot.lane.b32.xlu0 %v1382, 123
    %v1415 = vpop.permute.xlu0 %1414
    %1416 = vrot.lane.b32.xlu0 %v1383, 123
    %v1417 = vpop.permute.xlu0 %1416
    %1418 = vrot.lane.b32.xlu0 %v1384, 123
    %v1419 = vpop.permute.xlu0 %1418
    %1420 = vrot.lane.b32.xlu0 %v1385, 123
    %v1421 = vpop.permute.xlu0 %1420
    %1422 = vrot.lane.b32.xlu0 %v1386, 123
    %v1423 = vpop.permute.xlu0 %1422
    %1424 = vrot.lane.b32.xlu0 %v1387, 123
    %v1425 = vpop.permute.xlu0 %1424
    %1426 = vrot.lane.b32.xlu0 %v1388, 123
    %v1427 = vpop.permute.xlu0 %1426
    %1428 = vrot.lane.b32.xlu0 %v1389, 123
    %v1429 = vpop.permute.xlu0 %1428
    %1430 = vrot.lane.b32.xlu0 %v1390, 123
    %v1431 = vpop.permute.xlu0 %1430
    %1432 = vrot.lane.b32.xlu0 %v1391, 123
    %v1433 = vpop.permute.xlu0 %1432
    %1434 = vrot.lane.b32.xlu0 %v1392, 123
    %v1435 = vpop.permute.xlu0 %1434
    %1436 = vrot.lane.b32.xlu0 %v1393, 123
    %v1437 = vpop.permute.xlu0 %1436
    %1438 = vrot.lane.b32.xlu0 %v1394, 123
    %v1439 = vpop.permute.xlu0 %1438
    %1440 = vrot.lane.b32.xlu0 %v1395, 123
    %v1441 = vpop.permute.xlu0 %1440
    %1442 = vrot.lane.b32.xlu0 %v1396, 123
    %v1443 = vpop.permute.xlu0 %1442
    %1444 = vrot.lane.b32.xlu0 %v1397, 123
    %v1445 = vpop.permute.xlu0 %1444
    %vm1462 = vcmask 162816
    %v1463 = vsel %vm1462, %v1415, 0.0
    %v1464 = vsel %vm1462, %v1417, 0.0
    %v1465 = vadd.f32 %v1463, %v1464
    %v1466 = vsel %vm1462, %v1419, 0.0
    %v1467 = vadd.f32 %v1465, %v1466
    %v1468 = vsel %vm1462, %v1421, 0.0
    %v1469 = vadd.f32 %v1467, %v1468
    %v1470 = vsel %vm1462, %v1423, 0.0
    %v1471 = vadd.f32 %v1469, %v1470
    %v1472 = vsel %vm1462, %v1425, 0.0
    %v1473 = vadd.f32 %v1471, %v1472
    %v1474 = vsel %vm1462, %v1427, 0.0
    %v1475 = vadd.f32 %v1473, %v1474
    %v1476 = vsel %vm1462, %v1429, 0.0
    %v1477 = vadd.f32 %v1475, %v1476
    %v1478 = vsel %vm1462, %v1431, 0.0
    %v1479 = vadd.f32 %v1477, %v1478
    %v1480 = vsel %vm1462, %v1433, 0.0
    %v1481 = vadd.f32 %v1479, %v1480
    %v1482 = vsel %vm1462, %v1435, 0.0
    %v1483 = vadd.f32 %v1481, %v1482
    %v1484 = vsel %vm1462, %v1437, 0.0
    %v1485 = vadd.f32 %v1483, %v1484
    %v1486 = vsel %vm1462, %v1439, 0.0
    %v1487 = vadd.f32 %v1485, %v1486
    %v1488 = vsel %vm1462, %v1441, 0.0
    %v1489 = vadd.f32 %v1487, %v1488
    %v1490 = vsel %vm1462, %v1443, 0.0
    %v1491 = vadd.f32 %v1489, %v1490
    %v1492 = vsel %vm1462, %v1445, 0.0
    %v1493 = vadd.f32 %v1491, %v1492
    %1494 = vadd.xlane.f32.xlu0 %v1493
    %v1495 = vpop.xlane.xlu0 %1494
    %v1496 = vrot.slane %v1495, 4
    %v1497 = vadd.f32 %v1495, %v1496
    %v1498 = vrot.slane %v1497, 2
    %v1499 = vadd.f32 %v1497, %v1498
    %v1500 = vrot.slane %v1499, 1
    %v1501 = vadd.f32 %v1499, %v1500
    %s1502 = vtos %v1501
    %v1503 = vsel %vm116, 1.0, 0.0
    %v1504 = vsel %vm117, 1.0, 0.0
    %v1505 = vsel %vm118, 1.0, 0.0
    %v1506 = vsel %vm119, 1.0, 0.0
    %v1507 = vsel %vm120, 1.0, 0.0
    %v1508 = vsel %vm121, 1.0, 0.0
    %v1509 = vsel %vm122, 1.0, 0.0
    %v1510 = vsel %vm123, 1.0, 0.0
    %v1511 = vsel %vm124, 1.0, 0.0
    %v1512 = vsel %vm125, 1.0, 0.0
    %v1513 = vsel %vm126, 1.0, 0.0
    %v1514 = vsel %vm127, 1.0, 0.0
    %v1515 = vsel %vm128, 1.0, 0.0
    %v1516 = vsel %vm129, 1.0, 0.0
    %v1517 = vsel %vm130, 1.0, 0.0
    %v1518 = vsel %vm131, 1.0, 0.0
    %1535 = vrot.lane.b32.xlu0 %v1503, 124
    %v1536 = vpop.permute.xlu0 %1535
    %1537 = vrot.lane.b32.xlu0 %v1504, 124
    %v1538 = vpop.permute.xlu0 %1537
    %1539 = vrot.lane.b32.xlu0 %v1505, 124
    %v1540 = vpop.permute.xlu0 %1539
    %1541 = vrot.lane.b32.xlu0 %v1506, 124
    %v1542 = vpop.permute.xlu0 %1541
    %1543 = vrot.lane.b32.xlu0 %v1507, 124
    %v1544 = vpop.permute.xlu0 %1543
    %1545 = vrot.lane.b32.xlu0 %v1508, 124
    %v1546 = vpop.permute.xlu0 %1545
    %1547 = vrot.lane.b32.xlu0 %v1509, 124
    %v1548 = vpop.permute.xlu0 %1547
    %1549 = vrot.lane.b32.xlu0 %v1510, 124
    %v1550 = vpop.permute.xlu0 %1549
    %1551 = vrot.lane.b32.xlu0 %v1511, 124
    %v1552 = vpop.permute.xlu0 %1551
    %1553 = vrot.lane.b32.xlu0 %v1512, 124
    %v1554 = vpop.permute.xlu0 %1553
    %1555 = vrot.lane.b32.xlu0 %v1513, 124
    %v1556 = vpop.permute.xlu0 %1555
    %1557 = vrot.lane.b32.xlu0 %v1514, 124
    %v1558 = vpop.permute.xlu0 %1557
    %1559 = vrot.lane.b32.xlu0 %v1515, 124
    %v1560 = vpop.permute.xlu0 %1559
    %1561 = vrot.lane.b32.xlu0 %v1516, 124
    %v1562 = vpop.permute.xlu0 %1561
    %1563 = vrot.lane.b32.xlu0 %v1517, 124
    %v1564 = vpop.permute.xlu0 %1563
    %1565 = vrot.lane.b32.xlu0 %v1518, 124
    %v1566 = vpop.permute.xlu0 %1565
    %v1583 = vsel %vm949, %v1536, 0.0
    %v1584 = vsel %vm949, %v1538, 0.0
    %v1585 = vadd.f32 %v1583, %v1584
    %v1586 = vsel %vm949, %v1540, 0.0
    %v1587 = vadd.f32 %v1585, %v1586
    %v1588 = vsel %vm949, %v1542, 0.0
    %v1589 = vadd.f32 %v1587, %v1588
    %v1590 = vsel %vm949, %v1544, 0.0
    %v1591 = vadd.f32 %v1589, %v1590
    %v1592 = vsel %vm949, %v1546, 0.0
    %v1593 = vadd.f32 %v1591, %v1592
    %v1594 = vsel %vm949, %v1548, 0.0
    %v1595 = vadd.f32 %v1593, %v1594
    %v1596 = vsel %vm949, %v1550, 0.0
    %v1597 = vadd.f32 %v1595, %v1596
    %v1598 = vsel %vm949, %v1552, 0.0
    %v1599 = vadd.f32 %v1597, %v1598
    %v1600 = vsel %vm949, %v1554, 0.0
    %v1601 = vadd.f32 %v1599, %v1600
    %v1602 = vsel %vm949, %v1556, 0.0
    %v1603 = vadd.f32 %v1601, %v1602
    %v1604 = vsel %vm949, %v1558, 0.0
    %v1605 = vadd.f32 %v1603, %v1604
    %v1606 = vsel %vm949, %v1560, 0.0
    %v1607 = vadd.f32 %v1605, %v1606
    %v1608 = vsel %vm949, %v1562, 0.0
    %v1609 = vadd.f32 %v1607, %v1608
    %v1610 = vsel %vm949, %v1564, 0.0
    %v1611 = vadd.f32 %v1609, %v1610
    %v1612 = vsel %vm949, %v1566, 0.0
    %v1613 = vadd.f32 %v1611, %v1612
    %1614 = vadd.xlane.f32.xlu0 %v1613
    %v1615 = vpop.xlane.xlu0 %1614
    %v1616 = vrot.slane %v1615, 4
    %v1617 = vadd.f32 %v1615, %v1616
    %v1618 = vrot.slane %v1617, 2
    %v1619 = vadd.f32 %v1617, %v1618
    %v1620 = vrot.slane %v1619, 1
    %v1621 = vadd.f32 %v1619, %v1620
    %s1622 = vtos %v1621
    %v1623 = vlaneseq
    %v1624 = vand.u32 %v1623, 127
    %vm1625 = vcmp.eq.s32.totalorder %v1624, 0
    %v1626 = vstv %s428
    %v1627 = vsel %vm1625, %v1626, 0.0
    %vm1628 = vcmp.eq.s32.totalorder %v1624, 1
    %v1629 = vstv %s836
    %v1630 = vsel %vm1628, %v1629, 0.0
    %v1631 = vadd.f32 %v1627, %v1630
    %vm1632 = vcmp.eq.s32.totalorder %v1624, 2
    %v1633 = vstv %s989
    %v1634 = vsel %vm1632, %v1633, 0.0
    %v1635 = vadd.f32 %v1631, %v1634
    %vm1636 = vcmp.eq.s32.totalorder %v1624, 3
    %v1637 = vstv %s1109
    %v1638 = vsel %vm1636, %v1637, 0.0
    %v1639 = vadd.f32 %v1635, %v1638
    %vm1640 = vcmp.eq.s32.totalorder %v1624, 4
    %v1641 = vstv %s1502
    %v1642 = vsel %vm1640, %v1641, 0.0
    %v1643 = vadd.f32 %v1639, %v1642
    %vm1644 = vcmp.eq.s32.totalorder %v1624, 5
    %v1645 = vstv %s1622
    %v1646 = vsel %vm1644, %v1645, 0.0
    %v1647 = vadd.f32 %v1643, %v1646
    %v1648 = vld [vmem:[#allocation2] sm:$0xff]
    %v1649 = vadd.f32 %v1648, %v1647
    %1650 = vst [vmem:[#allocation2] sm:$0xff] %v1649
    // Predicated region
    $region14: #{tpu_custom_call.1} parent=1 // pred_check
      _
    $region15: #{tpu_custom_call.1} parent=1 // pred_check_branch
      %1652 = sbr.rel (0) target = $region17
    $region16: #{tpu_custom_call.1} parent=1 // pred_region
      %s1654 = ssub.s32 128, 128
      %1655 = vsyncadd [#allocation3], %s1654
      %s1657 = sshll.u32 [#allocation2], 4
      %s1658 = int_to_ptr.vmem [resolvable:$true] %s1657
      %1660 = dma.vmem_to_hbm [thread:$0]  %s1658, 128, %s2, [#allocation3]
    $region17: #{tpu_custom_call.1} parent=1 // pred_fallthru
      _
    // Predicated region
    $region18: #{tpu_custom_call.1} parent=1 // pred_check
      _
    $region19: #{tpu_custom_call.1} parent=1 // pred_check_branch
      %1662 = sbr.rel (0) target = $region21
    $region20: #{tpu_custom_call.1} parent=1 // pred_region
      %1663 = dma.done [#allocation3], 128
    $region21: #{tpu_custom_call.1} parent=1 // pred_fallthru
      _
    %1664 = vsyncpa [#allocation3], 1

</llo_original>
